<compile_context>
chip_gen: v6e
topology: v6e:2x2x1
jax: 0.10.0
libtpu: 0.0.40
codegen_flags: <defaults>
</compile_context>

<pallas_src>
import numpy as np
import jax
import jax.numpy as jnp
from jax import lax
from jax.experimental import pallas as pl
from jax.experimental.pallas import tpu as pltpu


def _pick_tile(hw, max_tile=2048):
    """Largest spatial tile (multiple of 128) dividing hw, capped at max_tile."""
    if hw <= max_tile:
        return hw
    t = (max_tile // 128) * 128
    while t >= 128:
        if hw % t == 0:
            return t
        t -= 128
    return hw


def _build_kernel(B, C, HW, T, TILE, do_reduce):
    HALF = TILE // 2
    INV24 = np.float32(1.0 / (1 << 24))
    TWO_PI = np.float32(2.0 * np.pi)

    def _hash(x):
        # Bijective 32-bit integer finalizer; int32 with wrapping arithmetic.
        # Logical right shift emulated via arithmetic shift + mask (portable).
        m = jnp.int32(0x045D9F3B)
        x = (x ^ ((x >> 16) & 0xFFFF)) * m
        x = (x ^ ((x >> 16) & 0xFFFF)) * m
        x = x ^ ((x >> 16) & 0xFFFF)
        return x

    def _std_normal(key):
        # (B, TILE) iid N(0,1): counter-based uniforms + Box-Muller (both outputs).
        r = lax.broadcasted_iota(jnp.int32, (B, HALF), 0)
        c = lax.broadcasted_iota(jnp.int32, (B, HALF), 1)
        idx = r * HALF + c
        b1 = _hash(idx + key)
        b2 = _hash(idx + key + jnp.int32(B * HALF))
        m1 = (b1 >> 8) & 0xFFFFFF
        m2 = (b2 >> 8) & 0xFFFFFF
        u1 = (m1 + 1).astype(jnp.float32) * INV24     # (0, 1]  -> log-safe
        u2 = m2.astype(jnp.float32) * INV24           # [0, 1)
        rad = jnp.sqrt(-2.0 * jnp.log(u1))
        th = TWO_PI * u2
        return jnp.concatenate([rad * jnp.cos(th), rad * jnp.sin(th)], axis=-1)

    def kernel(seed_ref, c1_ref, c2_ref, sv_ref, wm_ref, tb_ref,
               wr_ref, br_ref, xT_ref, out_ref):
        pid = pl.program_id(0)
        base_key = seed_ref[0] * jnp.int32(0x01000193) + pid * jnp.int32(B * TILE)

        def step(t, xs, with_noise):
            # eps = model(x_t, t): 1x1 channel mix + time-embedding + tanh,
            # fused directly into the posterior-mean update per channel.
            c1 = c1_ref[t]
            c2 = c2_ref[t]
            new = []
            for d in range(C):
                acc = xs[0] * wm_ref[0 * C + d]
                for cc in range(1, C):
                    acc = acc + xs[cc] * wm_ref[cc * C + d]
                eps_d = jnp.tanh(acc + tb_ref[d * T + t])
                x_new = c1 * xs[d] - c2 * eps_d
                if with_noise:
                    key = base_key + (t * jnp.int32(C) + jnp.int32(d)) * jnp.int32(B * HW)
                    x_new = x_new + sv_ref[t] * _std_normal(key)
                new.append(x_new)
            return tuple(new)

        xs0 = tuple(xT_ref[cc] for cc in range(C))      # per-channel (B, TILE)

        def body(i, xs):
            return step((T - 1) - i, xs, with_noise=True)

        xs = lax.fori_loop(0, T - 1, body, xs0)          # t = T-1 .. 1 (noisy)
        xs = step(0, xs, with_noise=False)               # t = 0, noise = 0

        if do_reduce:
            # 1x1 Conv2d(C -> 1) + clip, lane-dense (1, B, TILE) output block.
            y = xs[0] * wr_ref[0]
            for cc in range(1, C):
                y = y + xs[cc] * wr_ref[cc]
            out_ref[0] = jnp.clip(y + br_ref[0], -1.0, 1.0)
        else:
            for cc in range(C):
                out_ref[cc] = jnp.clip(xs[cc], -1.0, 1.0)

    return kernel


class GaussianDiffusionSamplerPallas:
    """Pallas TPU port of GaussianDiffusionSampler (Algorithm 2)."""

    def __init__(self, beta_1, beta_T, T, C=3):
        self.T = int(T)
        self.C = int(C)
        C = self.C

        # Schedule buffers: float64 (torch buffers are .double()), cast to f32.
        betas = np.linspace(beta_1, beta_T, T, dtype=np.float64)
        alphas = 1.0 - betas
        alphas_bar = np.cumprod(alphas)
        alphas_bar_prev = np.concatenate([[1.0], alphas_bar])[:T]
        coeff1 = np.sqrt(1.0 / alphas)
        coeff2 = coeff1 * (1.0 - alphas) / np.sqrt(1.0 - alphas_bar)
        posterior_var = betas * (1.0 - alphas_bar_prev) / (1.0 - alphas_bar)
        var = np.concatenate([posterior_var[1:2], betas[1:]])   # p_mean_variance
        if var.size == 0:            # T == 1: variance never used (t==0 noiseless)
            var = np.zeros((1,), np.float64)
        self.coeff1 = jnp.asarray(coeff1, jnp.float32)
        self.coeff2 = jnp.asarray(coeff2, jnp.float32)
        self.sqrt_var = jnp.asarray(np.sqrt(var), jnp.float32)

        # TODO(synk): self.model is an external UNet in the torch module; replaced
        # here by a deterministic synthetic eps-predictor (1x1 channel mix +
        # per-timestep embedding + tanh) with fixed random weights.
        kw, kb, kt, kr = jax.random.split(jax.random.PRNGKey(0), 4)
        w_model = 0.3 * jax.random.normal(kw, (C, C), jnp.float32)
        b_model = 0.05 * jax.random.normal(kb, (C,), jnp.float32)
        temb = 0.1 * jax.random.normal(kt, (self.T, C), jnp.float32)
        self.w_model_flat = w_model.reshape(-1)                         # [c*C + d]
        # Fold the model bias into the time-embedding table; flat [d*T + t].
        self.temb_bias_flat = (temb + b_model[None, :]).T.reshape(-1)
        # nn.Conv2d(3, 1, kernel_size=1): weight (1,C,1,1) -> (C,), bias (1,)
        self.w_reduce = jax.random.normal(kr, (C,), jnp.float32) / C
        self.b_reduce = jnp.zeros((1,), jnp.float32)

    def __call__(self, x_T, seed=0, reduce=False):
        B, C, H, W = x_T.shape
        assert C == self.C
        HW = H * W
        T = self.T
        TILE = _pick_tile(HW)
        assert TILE % 2 == 0
        n_tiles = HW // TILE
        C_out = 1 if reduce else C

        # (B, C, H, W) -> (C, B, H*W): channel leading, spatial lane-dense.
        x_cbhw = jnp.transpose(x_T.reshape(B, C, HW), (1, 0, 2)).astype(jnp.float32)
        seed_arr = jnp.asarray([seed], jnp.int32)

        smem = pl.BlockSpec(memory_space=pltpu.MemorySpace.SMEM)
        kernel = _build_kernel(B, C, HW, T, TILE, reduce)
        out = pl.pallas_call(
            kernel,
            out_shape=jax.ShapeDtypeStruct((C_out, B, HW), jnp.float32),
            grid=(n_tiles,),
            in_specs=[
                smem, smem, smem, smem,        # seed, coeff1, coeff2, sqrt_var
                smem, smem, smem, smem,        # w_model, temb+bias, w_reduce, b_reduce
                pl.BlockSpec((C, B, TILE), lambda s: (0, 0, s)),   # x_T tile
            ],
            out_specs=pl.BlockSpec((C_out, B, TILE), lambda s: (0, 0, s)),
            compiler_params=pltpu.CompilerParams(
                dimension_semantics=("parallel",)),
        )(seed_arr, self.coeff1, self.coeff2, self.sqrt_var,
          self.w_model_flat, self.temb_bias_flat,
          self.w_reduce, self.b_reduce, x_cbhw)
        return jnp.transpose(out, (1, 0, 2)).reshape(B, C_out, H, W)


if __name__ == "__main__":
    B, C, H, W = 2, 3, 16, 16
    T = 8
    beta_1, beta_T = 1e-4, 0.02

    sampler = GaussianDiffusionSamplerPallas(beta_1, beta_T, T, C=C)

    key = jax.random.PRNGKey(0)
    x_T = jax.random.normal(key, (B, C, H, W), jnp.float32)

    # forward(x_T, reduce=False)
    x0 = jax.block_until_ready(sampler(x_T, seed=0, reduce=False))
    assert x0.shape == (B, C, H, W)
    assert bool(jnp.all(jnp.isfinite(x0)))
    assert bool(jnp.all(x0 <= 1.0)) and bool(jnp.all(x0 >= -1.0))

    # forward(x_T, reduce=True): 1x1 Conv2d(3 -> 1) + clip, fused in the kernel.
    x0_red = jax.block_until_ready(sampler(x_T, seed=0, reduce=True))
    assert x0_red.shape == (B, 1, H, W)
    assert bool(jnp.all(jnp.isfinite(x0_red)))
    assert bool(jnp.all(x0_red <= 1.0)) and bool(jnp.all(x0_red >= -1.0))

    print("KERNEL_OK")
</pallas_src>

<mosaic_0001>
module attributes {stable_mosaic.version = 11 : i64} {
  func.func @kernel(%arg0: i32, %arg1: memref<1xi32, #tpu.memory_space<smem>>, %arg2: memref<8xf32, #tpu.memory_space<smem>>, %arg3: memref<8xf32, #tpu.memory_space<smem>>, %arg4: memref<8xf32, #tpu.memory_space<smem>>, %arg5: memref<9xf32, #tpu.memory_space<smem>>, %arg6: memref<24xf32, #tpu.memory_space<smem>>, %arg7: memref<3xf32, #tpu.memory_space<smem>>, %arg8: memref<1xf32, #tpu.memory_space<smem>>, %arg9: memref<3x2x256xf32, #tpu.memory_space<vmem>>, %arg10: memref<3x2x256xf32, #tpu.memory_space<vmem>>) attributes {dimension_semantics = [#tpu.dimension_semantics<parallel>], iteration_bounds = array<i64: 1>, scalar_prefetch = 0 : i64, scratch_operands = 0 : i64, tpu.core_type = #tpu.core_type<tc>, window_params = [{transform_indices = @transform_0, window_bounds = array<i64: 1>}, {transform_indices = @transform_1, window_bounds = array<i64: 8>}, {transform_indices = @transform_2, window_bounds = array<i64: 8>}, {transform_indices = @transform_3, window_bounds = array<i64: 8>}, {transform_indices = @transform_4, window_bounds = array<i64: 9>}, {transform_indices = @transform_5, window_bounds = array<i64: 24>}, {transform_indices = @transform_6, window_bounds = array<i64: 3>}, {transform_indices = @transform_7, window_bounds = array<i64: 1>}, {transform_indices = @transform_8, window_bounds = array<i64: 3, 2, 256>}, {transform_indices = @transform_9, window_bounds = array<i64: 3, 2, 256>}]} {
    %c0 = arith.constant 0 : index
    %0 = memref.load %arg1[%c0] : memref<1xi32, #tpu.memory_space<smem>>
    %c16777619_i32 = arith.constant 16777619 : i32
    %1 = arith.muli %0, %c16777619_i32 : i32
    %c512_i32 = arith.constant 512 : i32
    %2 = arith.muli %arg0, %c512_i32 : i32
    %3 = arith.addi %1, %2 : i32
    %c0_0 = arith.constant 0 : index
    %c0_1 = arith.constant 0 : index
    %c0_2 = arith.constant 0 : index
    %4 = vector.load %arg9[%c0_0, %c0_1, %c0_2] : memref<3x2x256xf32, #tpu.memory_space<vmem>>, vector<1x2x256xf32>
    %5 = vector.shape_cast %4 : vector<1x2x256xf32> to vector<2x256xf32>
    %c1 = arith.constant 1 : index
    %c0_3 = arith.constant 0 : index
    %c0_4 = arith.constant 0 : index
    %6 = vector.load %arg9[%c1, %c0_3, %c0_4] : memref<3x2x256xf32, #tpu.memory_space<vmem>>, vector<1x2x256xf32>
    %7 = vector.shape_cast %6 : vector<1x2x256xf32> to vector<2x256xf32>
    %c2 = arith.constant 2 : index
    %c0_5 = arith.constant 0 : index
    %c0_6 = arith.constant 0 : index
    %8 = vector.load %arg9[%c2, %c0_5, %c0_6] : memref<3x2x256xf32, #tpu.memory_space<vmem>>, vector<1x2x256xf32>
    %9 = vector.shape_cast %8 : vector<1x2x256xf32> to vector<2x256xf32>
    %c0_i32 = arith.constant 0 : i32
    %c7_i32 = arith.constant 7 : i32
    %10 = arith.addi %c0_i32, %c7_i32 : i32
    %c1_i32 = arith.constant 1 : i32
    %11:3 = scf.for %arg11 = %c0_i32 to %10 step %c1_i32 iter_args(%arg12 = %5, %arg13 = %7, %arg14 = %9) -> (vector<2x256xf32>, vector<2x256xf32>, vector<2x256xf32>)  : i32 {
      %c7_i32_29 = arith.constant 7 : i32
      %95 = arith.subi %c7_i32_29, %arg11 : i32
      %96 = arith.index_cast %95 : i32 to index
      %97 = memref.load %arg2[%96] : memref<8xf32, #tpu.memory_space<smem>>
      %98 = arith.index_cast %95 : i32 to index
      %99 = memref.load %arg3[%98] : memref<8xf32, #tpu.memory_space<smem>>
      %c0_30 = arith.constant 0 : index
      %100 = memref.load %arg5[%c0_30] : memref<9xf32, #tpu.memory_space<smem>>
      %101 = vector.broadcast %100 : f32 to vector<2x256xf32>
      %102 = arith.mulf %arg12, %101 : vector<2x256xf32>
      %c3_31 = arith.constant 3 : index
      %103 = memref.load %arg5[%c3_31] : memref<9xf32, #tpu.memory_space<smem>>
      %104 = vector.broadcast %103 : f32 to vector<2x256xf32>
      %105 = arith.mulf %arg13, %104 : vector<2x256xf32>
      %106 = arith.addf %102, %105 : vector<2x256xf32>
      %c6_32 = arith.constant 6 : index
      %107 = memref.load %arg5[%c6_32] : memref<9xf32, #tpu.memory_space<smem>>
      %108 = vector.broadcast %107 : f32 to vector<2x256xf32>
      %109 = arith.mulf %arg14, %108 : vector<2x256xf32>
      %110 = arith.addf %106, %109 : vector<2x256xf32>
      %c0_i32_33 = arith.constant 0 : i32
      %111 = arith.addi %c0_i32_33, %95 : i32
      %112 = arith.index_cast %111 : i32 to index
      %113 = memref.load %arg6[%112] : memref<24xf32, #tpu.memory_space<smem>>
      %114 = vector.broadcast %113 : f32 to vector<2x256xf32>
      %115 = arith.addf %110, %114 : vector<2x256xf32>
      %116 = math.tanh %115 : vector<2x256xf32>
      %117 = vector.broadcast %97 : f32 to vector<2x256xf32>
      %118 = arith.mulf %117, %arg12 : vector<2x256xf32>
      %119 = vector.broadcast %99 : f32 to vector<2x256xf32>
      %120 = arith.mulf %119, %116 : vector<2x256xf32>
      %121 = arith.subf %118, %120 : vector<2x256xf32>
      %c3_i32 = arith.constant 3 : i32
      %122 = arith.muli %95, %c3_i32 : i32
      %c0_i32_34 = arith.constant 0 : i32
      %123 = arith.addi %122, %c0_i32_34 : i32
      %c512_i32_35 = arith.constant 512 : i32
      %124 = arith.muli %123, %c512_i32_35 : i32
      %125 = arith.addi %3, %124 : i32
      %126 = arith.index_cast %95 : i32 to index
      %127 = memref.load %arg4[%126] : memref<8xf32, #tpu.memory_space<smem>>
      %128 = tpu.iota {dimensions = array<i32: 0>} : vector<2x128xi32>
      %129 = tpu.iota {dimensions = array<i32: 1>} : vector<2x128xi32>
      %c128_i32 = arith.constant 128 : i32
      %130 = vector.broadcast %c128_i32 : i32 to vector<2x128xi32>
      %131 = arith.muli %128, %130 : vector<2x128xi32>
      %132 = arith.addi %131, %129 : vector<2x128xi32>
      %133 = vector.broadcast %125 : i32 to vector<2x128xi32>
      %134 = arith.addi %132, %133 : vector<2x128xi32>
      %c16_i32 = arith.constant 16 : i32
      %135 = vector.broadcast %c16_i32 : i32 to vector<2x128xi32>
      %136 = arith.shrsi %134, %135 : vector<2x128xi32>
      %c65535_i32 = arith.constant 65535 : i32
      %137 = vector.broadcast %c65535_i32 : i32 to vector<2x128xi32>
      %138 = arith.andi %136, %137 : vector<2x128xi32>
      %139 = arith.xori %134, %138 : vector<2x128xi32>
      %c73244475_i32 = arith.constant 73244475 : i32
      %140 = vector.broadcast %c73244475_i32 : i32 to vector<2x128xi32>
      %141 = arith.muli %139, %140 : vector<2x128xi32>
      %c16_i32_36 = arith.constant 16 : i32
      %142 = vector.broadcast %c16_i32_36 : i32 to vector<2x128xi32>
      %143 = arith.shrsi %141, %142 : vector<2x128xi32>
      %c65535_i32_37 = arith.constant 65535 : i32
      %144 = vector.broadcast %c65535_i32_37 : i32 to vector<2x128xi32>
      %145 = arith.andi %143, %144 : vector<2x128xi32>
      %146 = arith.xori %141, %145 : vector<2x128xi32>
      %c73244475_i32_38 = arith.constant 73244475 : i32
      %147 = vector.broadcast %c73244475_i32_38 : i32 to vector<2x128xi32>
      %148 = arith.muli %146, %147 : vector<2x128xi32>
      %c16_i32_39 = arith.constant 16 : i32
      %149 = vector.broadcast %c16_i32_39 : i32 to vector<2x128xi32>
      %150 = arith.shrsi %148, %149 : vector<2x128xi32>
      %c65535_i32_40 = arith.constant 65535 : i32
      %151 = vector.broadcast %c65535_i32_40 : i32 to vector<2x128xi32>
      %152 = arith.andi %150, %151 : vector<2x128xi32>
      %153 = arith.xori %148, %152 : vector<2x128xi32>
      %154 = vector.broadcast %125 : i32 to vector<2x128xi32>
      %155 = arith.addi %132, %154 : vector<2x128xi32>
      %c256_i32 = arith.constant 256 : i32
      %156 = vector.broadcast %c256_i32 : i32 to vector<2x128xi32>
      %157 = arith.addi %155, %156 : vector<2x128xi32>
      %c16_i32_41 = arith.constant 16 : i32
      %158 = vector.broadcast %c16_i32_41 : i32 to vector<2x128xi32>
      %159 = arith.shrsi %157, %158 : vector<2x128xi32>
      %c65535_i32_42 = arith.constant 65535 : i32
      %160 = vector.broadcast %c65535_i32_42 : i32 to vector<2x128xi32>
      %161 = arith.andi %159, %160 : vector<2x128xi32>
      %162 = arith.xori %157, %161 : vector<2x128xi32>
      %c73244475_i32_43 = arith.constant 73244475 : i32
      %163 = vector.broadcast %c73244475_i32_43 : i32 to vector<2x128xi32>
      %164 = arith.muli %162, %163 : vector<2x128xi32>
      %c16_i32_44 = arith.constant 16 : i32
      %165 = vector.broadcast %c16_i32_44 : i32 to vector<2x128xi32>
      %166 = arith.shrsi %164, %165 : vector<2x128xi32>
      %c65535_i32_45 = arith.constant 65535 : i32
      %167 = vector.broadcast %c65535_i32_45 : i32 to vector<2x128xi32>
      %168 = arith.andi %166, %167 : vector<2x128xi32>
      %169 = arith.xori %164, %168 : vector<2x128xi32>
      %c73244475_i32_46 = arith.constant 73244475 : i32
      %170 = vector.broadcast %c73244475_i32_46 : i32 to vector<2x128xi32>
      %171 = arith.muli %169, %170 : vector<2x128xi32>
      %c16_i32_47 = arith.constant 16 : i32
      %172 = vector.broadcast %c16_i32_47 : i32 to vector<2x128xi32>
      %173 = arith.shrsi %171, %172 : vector<2x128xi32>
      %c65535_i32_48 = arith.constant 65535 : i32
      %174 = vector.broadcast %c65535_i32_48 : i32 to vector<2x128xi32>
      %175 = arith.andi %173, %174 : vector<2x128xi32>
      %176 = arith.xori %171, %175 : vector<2x128xi32>
      %c8_i32 = arith.constant 8 : i32
      %177 = vector.broadcast %c8_i32 : i32 to vector<2x128xi32>
      %178 = arith.shrsi %153, %177 : vector<2x128xi32>
      %c16777215_i32 = arith.constant 16777215 : i32
      %179 = vector.broadcast %c16777215_i32 : i32 to vector<2x128xi32>
      %180 = arith.andi %178, %179 : vector<2x128xi32>
      %c8_i32_49 = arith.constant 8 : i32
      %181 = vector.broadcast %c8_i32_49 : i32 to vector<2x128xi32>
      %182 = arith.shrsi %176, %181 : vector<2x128xi32>
      %c16777215_i32_50 = arith.constant 16777215 : i32
      %183 = vector.broadcast %c16777215_i32_50 : i32 to vector<2x128xi32>
      %184 = arith.andi %182, %183 : vector<2x128xi32>
      %c1_i32_51 = arith.constant 1 : i32
      %185 = vector.broadcast %c1_i32_51 : i32 to vector<2x128xi32>
      %186 = arith.addi %180, %185 : vector<2x128xi32>
      %187 = arith.sitofp %186 : vector<2x128xi32> to vector<2x128xf32>
      %cst_52 = arith.constant 5.96046448E-8 : f32
      %188 = vector.broadcast %cst_52 : f32 to vector<2x128xf32>
      %189 = arith.mulf %187, %188 : vector<2x128xf32>
      %190 = arith.sitofp %184 : vector<2x128xi32> to vector<2x128xf32>
      %cst_53 = arith.constant 5.96046448E-8 : f32
      %191 = vector.broadcast %cst_53 : f32 to vector<2x128xf32>
      %192 = arith.mulf %190, %191 : vector<2x128xf32>
      %193 = math.log %189 : vector<2x128xf32>
      %cst_54 = arith.constant -2.000000e+00 : f32
      %194 = vector.broadcast %cst_54 : f32 to vector<2x128xf32>
      %195 = arith.mulf %194, %193 : vector<2x128xf32>
      %196 = math.sqrt %195 : vector<2x128xf32>
      %cst_55 = arith.constant 6.28318548 : f32
      %197 = vector.broadcast %cst_55 : f32 to vector<2x128xf32>
      %198 = arith.mulf %197, %192 : vector<2x128xf32>
      %199 = math.cos %198 : vector<2x128xf32>
      %200 = arith.mulf %196, %199 : vector<2x128xf32>
      %201 = math.sin %198 : vector<2x128xf32>
      %202 = arith.mulf %196, %201 : vector<2x128xf32>
      %203 = tpu.concatenate %200, %202 in 1 : vector<2x128xf32>, vector<2x128xf32> -> vector<2x256xf32>
      %204 = vector.broadcast %127 : f32 to vector<2x256xf32>
      %205 = arith.mulf %204, %203 : vector<2x256xf32>
      %206 = arith.addf %121, %205 : vector<2x256xf32>
      %c1_56 = arith.constant 1 : index
      %207 = memref.load %arg5[%c1_56] : memref<9xf32, #tpu.memory_space<smem>>
      %208 = vector.broadcast %207 : f32 to vector<2x256xf32>
      %209 = arith.mulf %arg12, %208 : vector<2x256xf32>
      %c4_57 = arith.constant 4 : index
      %210 = memref.load %arg5[%c4_57] : memref<9xf32, #tpu.memory_space<smem>>
      %211 = vector.broadcast %210 : f32 to vector<2x256xf32>
      %212 = arith.mulf %arg13, %211 : vector<2x256xf32>
      %213 = arith.addf %209, %212 : vector<2x256xf32>
      %c7_58 = arith.constant 7 : index
      %214 = memref.load %arg5[%c7_58] : memref<9xf32, #tpu.memory_space<smem>>
      %215 = vector.broadcast %214 : f32 to vector<2x256xf32>
      %216 = arith.mulf %arg14, %215 : vector<2x256xf32>
      %217 = arith.addf %213, %216 : vector<2x256xf32>
      %c8_i32_59 = arith.constant 8 : i32
      %218 = arith.addi %c8_i32_59, %95 : i32
      %219 = arith.index_cast %218 : i32 to index
      %220 = memref.load %arg6[%219] : memref<24xf32, #tpu.memory_space<smem>>
      %221 = vector.broadcast %220 : f32 to vector<2x256xf32>
      %222 = arith.addf %217, %221 : vector<2x256xf32>
      %223 = math.tanh %222 : vector<2x256xf32>
      %224 = vector.broadcast %97 : f32 to vector<2x256xf32>
      %225 = arith.mulf %224, %arg13 : vector<2x256xf32>
      %226 = vector.broadcast %99 : f32 to vector<2x256xf32>
      %227 = arith.mulf %226, %223 : vector<2x256xf32>
      %228 = arith.subf %225, %227 : vector<2x256xf32>
      %c3_i32_60 = arith.constant 3 : i32
      %229 = arith.muli %95, %c3_i32_60 : i32
      %c1_i32_61 = arith.constant 1 : i32
      %230 = arith.addi %229, %c1_i32_61 : i32
      %c512_i32_62 = arith.constant 512 : i32
      %231 = arith.muli %230, %c512_i32_62 : i32
      %232 = arith.addi %3, %231 : i32
      %233 = arith.index_cast %95 : i32 to index
      %234 = memref.load %arg4[%233] : memref<8xf32, #tpu.memory_space<smem>>
      %235 = tpu.iota {dimensions = array<i32: 0>} : vector<2x128xi32>
      %236 = tpu.iota {dimensions = array<i32: 1>} : vector<2x128xi32>
      %c128_i32_63 = arith.constant 128 : i32
      %237 = vector.broadcast %c128_i32_63 : i32 to vector<2x128xi32>
      %238 = arith.muli %235, %237 : vector<2x128xi32>
      %239 = arith.addi %238, %236 : vector<2x128xi32>
      %240 = vector.broadcast %232 : i32 to vector<2x128xi32>
      %241 = arith.addi %239, %240 : vector<2x128xi32>
      %c16_i32_64 = arith.constant 16 : i32
      %242 = vector.broadcast %c16_i32_64 : i32 to vector<2x128xi32>
      %243 = arith.shrsi %241, %242 : vector<2x128xi32>
      %c65535_i32_65 = arith.constant 65535 : i32
      %244 = vector.broadcast %c65535_i32_65 : i32 to vector<2x128xi32>
      %245 = arith.andi %243, %244 : vector<2x128xi32>
      %246 = arith.xori %241, %245 : vector<2x128xi32>
      %c73244475_i32_66 = arith.constant 73244475 : i32
      %247 = vector.broadcast %c73244475_i32_66 : i32 to vector<2x128xi32>
      %248 = arith.muli %246, %247 : vector<2x128xi32>
      %c16_i32_67 = arith.constant 16 : i32
      %249 = vector.broadcast %c16_i32_67 : i32 to vector<2x128xi32>
      %250 = arith.shrsi %248, %249 : vector<2x128xi32>
      %c65535_i32_68 = arith.constant 65535 : i32
      %251 = vector.broadcast %c65535_i32_68 : i32 to vector<2x128xi32>
      %252 = arith.andi %250, %251 : vector<2x128xi32>
      %253 = arith.xori %248, %252 : vector<2x128xi32>
      %c73244475_i32_69 = arith.constant 73244475 : i32
      %254 = vector.broadcast %c73244475_i32_69 : i32 to vector<2x128xi32>
      %255 = arith.muli %253, %254 : vector<2x128xi32>
      %c16_i32_70 = arith.constant 16 : i32
      %256 = vector.broadcast %c16_i32_70 : i32 to vector<2x128xi32>
      %257 = arith.shrsi %255, %256 : vector<2x128xi32>
      %c65535_i32_71 = arith.constant 65535 : i32
      %258 = vector.broadcast %c65535_i32_71 : i32 to vector<2x128xi32>
      %259 = arith.andi %257, %258 : vector<2x128xi32>
      %260 = arith.xori %255, %259 : vector<2x128xi32>
      %261 = vector.broadcast %232 : i32 to vector<2x128xi32>
      %262 = arith.addi %239, %261 : vector<2x128xi32>
      %c256_i32_72 = arith.constant 256 : i32
      %263 = vector.broadcast %c256_i32_72 : i32 to vector<2x128xi32>
      %264 = arith.addi %262, %263 : vector<2x128xi32>
      %c16_i32_73 = arith.constant 16 : i32
      %265 = vector.broadcast %c16_i32_73 : i32 to vector<2x128xi32>
      %266 = arith.shrsi %264, %265 : vector<2x128xi32>
      %c65535_i32_74 = arith.constant 65535 : i32
      %267 = vector.broadcast %c65535_i32_74 : i32 to vector<2x128xi32>
      %268 = arith.andi %266, %267 : vector<2x128xi32>
      %269 = arith.xori %264, %268 : vector<2x128xi32>
      %c73244475_i32_75 = arith.constant 73244475 : i32
      %270 = vector.broadcast %c73244475_i32_75 : i32 to vector<2x128xi32>
      %271 = arith.muli %269, %270 : vector<2x128xi32>
      %c16_i32_76 = arith.constant 16 : i32
      %272 = vector.broadcast %c16_i32_76 : i32 to vector<2x128xi32>
      %273 = arith.shrsi %271, %272 : vector<2x128xi32>
      %c65535_i32_77 = arith.constant 65535 : i32
      %274 = vector.broadcast %c65535_i32_77 : i32 to vector<2x128xi32>
      %275 = arith.andi %273, %274 : vector<2x128xi32>
      %276 = arith.xori %271, %275 : vector<2x128xi32>
      %c73244475_i32_78 = arith.constant 73244475 : i32
      %277 = vector.broadcast %c73244475_i32_78 : i32 to vector<2x128xi32>
      %278 = arith.muli %276, %277 : vector<2x128xi32>
      %c16_i32_79 = arith.constant 16 : i32
      %279 = vector.broadcast %c16_i32_79 : i32 to vector<2x128xi32>
      %280 = arith.shrsi %278, %279 : vector<2x128xi32>
      %c65535_i32_80 = arith.constant 65535 : i32
      %281 = vector.broadcast %c65535_i32_80 : i32 to vector<2x128xi32>
      %282 = arith.andi %280, %281 : vector<2x128xi32>
      %283 = arith.xori %278, %282 : vector<2x128xi32>
      %c8_i32_81 = arith.constant 8 : i32
      %284 = vector.broadcast %c8_i32_81 : i32 to vector<2x128xi32>
      %285 = arith.shrsi %260, %284 : vector<2x128xi32>
      %c16777215_i32_82 = arith.constant 16777215 : i32
      %286 = vector.broadcast %c16777215_i32_82 : i32 to vector<2x128xi32>
      %287 = arith.andi %285, %286 : vector<2x128xi32>
      %c8_i32_83 = arith.constant 8 : i32
      %288 = vector.broadcast %c8_i32_83 : i32 to vector<2x128xi32>
      %289 = arith.shrsi %283, %288 : vector<2x128xi32>
      %c16777215_i32_84 = arith.constant 16777215 : i32
      %290 = vector.broadcast %c16777215_i32_84 : i32 to vector<2x128xi32>
      %291 = arith.andi %289, %290 : vector<2x128xi32>
      %c1_i32_85 = arith.constant 1 : i32
      %292 = vector.broadcast %c1_i32_85 : i32 to vector<2x128xi32>
      %293 = arith.addi %287, %292 : vector<2x128xi32>
      %294 = arith.sitofp %293 : vector<2x128xi32> to vector<2x128xf32>
      %cst_86 = arith.constant 5.96046448E-8 : f32
      %295 = vector.broadcast %cst_86 : f32 to vector<2x128xf32>
      %296 = arith.mulf %294, %295 : vector<2x128xf32>
      %297 = arith.sitofp %291 : vector<2x128xi32> to vector<2x128xf32>
      %cst_87 = arith.constant 5.96046448E-8 : f32
      %298 = vector.broadcast %cst_87 : f32 to vector<2x128xf32>
      %299 = arith.mulf %297, %298 : vector<2x128xf32>
      %300 = math.log %296 : vector<2x128xf32>
      %cst_88 = arith.constant -2.000000e+00 : f32
      %301 = vector.broadcast %cst_88 : f32 to vector<2x128xf32>
      %302 = arith.mulf %301, %300 : vector<2x128xf32>
      %303 = math.sqrt %302 : vector<2x128xf32>
      %cst_89 = arith.constant 6.28318548 : f32
      %304 = vector.broadcast %cst_89 : f32 to vector<2x128xf32>
      %305 = arith.mulf %304, %299 : vector<2x128xf32>
      %306 = math.cos %305 : vector<2x128xf32>
      %307 = arith.mulf %303, %306 : vector<2x128xf32>
      %308 = math.sin %305 : vector<2x128xf32>
      %309 = arith.mulf %303, %308 : vector<2x128xf32>
      %310 = tpu.concatenate %307, %309 in 1 : vector<2x128xf32>, vector<2x128xf32> -> vector<2x256xf32>
      %311 = vector.broadcast %234 : f32 to vector<2x256xf32>
      %312 = arith.mulf %311, %310 : vector<2x256xf32>
      %313 = arith.addf %228, %312 : vector<2x256xf32>
      %c2_90 = arith.constant 2 : index
      %314 = memref.load %arg5[%c2_90] : memref<9xf32, #tpu.memory_space<smem>>
      %315 = vector.broadcast %314 : f32 to vector<2x256xf32>
      %316 = arith.mulf %arg12, %315 : vector<2x256xf32>
      %c5_91 = arith.constant 5 : index
      %317 = memref.load %arg5[%c5_91] : memref<9xf32, #tpu.memory_space<smem>>
      %318 = vector.broadcast %317 : f32 to vector<2x256xf32>
      %319 = arith.mulf %arg13, %318 : vector<2x256xf32>
      %320 = arith.addf %316, %319 : vector<2x256xf32>
      %c8_92 = arith.constant 8 : index
      %321 = memref.load %arg5[%c8_92] : memref<9xf32, #tpu.memory_space<smem>>
      %322 = vector.broadcast %321 : f32 to vector<2x256xf32>
      %323 = arith.mulf %arg14, %322 : vector<2x256xf32>
      %324 = arith.addf %320, %323 : vector<2x256xf32>
      %c16_i32_93 = arith.constant 16 : i32
      %325 = arith.addi %c16_i32_93, %95 : i32
      %326 = arith.index_cast %325 : i32 to index
      %327 = memref.load %arg6[%326] : memref<24xf32, #tpu.memory_space<smem>>
      %328 = vector.broadcast %327 : f32 to vector<2x256xf32>
      %329 = arith.addf %324, %328 : vector<2x256xf32>
      %330 = math.tanh %329 : vector<2x256xf32>
      %331 = vector.broadcast %97 : f32 to vector<2x256xf32>
      %332 = arith.mulf %331, %arg14 : vector<2x256xf32>
      %333 = vector.broadcast %99 : f32 to vector<2x256xf32>
      %334 = arith.mulf %333, %330 : vector<2x256xf32>
      %335 = arith.subf %332, %334 : vector<2x256xf32>
      %c3_i32_94 = arith.constant 3 : i32
      %336 = arith.muli %95, %c3_i32_94 : i32
      %c2_i32 = arith.constant 2 : i32
      %337 = arith.addi %336, %c2_i32 : i32
      %c512_i32_95 = arith.constant 512 : i32
      %338 = arith.muli %337, %c512_i32_95 : i32
      %339 = arith.addi %3, %338 : i32
      %340 = arith.index_cast %95 : i32 to index
      %341 = memref.load %arg4[%340] : memref<8xf32, #tpu.memory_space<smem>>
      %342 = tpu.iota {dimensions = array<i32: 0>} : vector<2x128xi32>
      %343 = tpu.iota {dimensions = array<i32: 1>} : vector<2x128xi32>
      %c128_i32_96 = arith.constant 128 : i32
      %344 = vector.broadcast %c128_i32_96 : i32 to vector<2x128xi32>
      %345 = arith.muli %342, %344 : vector<2x128xi32>
      %346 = arith.addi %345, %343 : vector<2x128xi32>
      %347 = vector.broadcast %339 : i32 to vector<2x128xi32>
      %348 = arith.addi %346, %347 : vector<2x128xi32>
      %c16_i32_97 = arith.constant 16 : i32
      %349 = vector.broadcast %c16_i32_97 : i32 to vector<2x128xi32>
      %350 = arith.shrsi %348, %349 : vector<2x128xi32>
      %c65535_i32_98 = arith.constant 65535 : i32
      %351 = vector.broadcast %c65535_i32_98 : i32 to vector<2x128xi32>
      %352 = arith.andi %350, %351 : vector<2x128xi32>
      %353 = arith.xori %348, %352 : vector<2x128xi32>
      %c73244475_i32_99 = arith.constant 73244475 : i32
      %354 = vector.broadcast %c73244475_i32_99 : i32 to vector<2x128xi32>
      %355 = arith.muli %353, %354 : vector<2x128xi32>
      %c16_i32_100 = arith.constant 16 : i32
      %356 = vector.broadcast %c16_i32_100 : i32 to vector<2x128xi32>
      %357 = arith.shrsi %355, %356 : vector<2x128xi32>
      %c65535_i32_101 = arith.constant 65535 : i32
      %358 = vector.broadcast %c65535_i32_101 : i32 to vector<2x128xi32>
      %359 = arith.andi %357, %358 : vector<2x128xi32>
      %360 = arith.xori %355, %359 : vector<2x128xi32>
      %c73244475_i32_102 = arith.constant 73244475 : i32
      %361 = vector.broadcast %c73244475_i32_102 : i32 to vector<2x128xi32>
      %362 = arith.muli %360, %361 : vector<2x128xi32>
      %c16_i32_103 = arith.constant 16 : i32
      %363 = vector.broadcast %c16_i32_103 : i32 to vector<2x128xi32>
      %364 = arith.shrsi %362, %363 : vector<2x128xi32>
      %c65535_i32_104 = arith.constant 65535 : i32
      %365 = vector.broadcast %c65535_i32_104 : i32 to vector<2x128xi32>
      %366 = arith.andi %364, %365 : vector<2x128xi32>
      %367 = arith.xori %362, %366 : vector<2x128xi32>
      %368 = vector.broadcast %339 : i32 to vector<2x128xi32>
      %369 = arith.addi %346, %368 : vector<2x128xi32>
      %c256_i32_105 = arith.constant 256 : i32
      %370 = vector.broadcast %c256_i32_105 : i32 to vector<2x128xi32>
      %371 = arith.addi %369, %370 : vector<2x128xi32>
      %c16_i32_106 = arith.constant 16 : i32
      %372 = vector.broadcast %c16_i32_106 : i32 to vector<2x128xi32>
      %373 = arith.shrsi %371, %372 : vector<2x128xi32>
      %c65535_i32_107 = arith.constant 65535 : i32
      %374 = vector.broadcast %c65535_i32_107 : i32 to vector<2x128xi32>
      %375 = arith.andi %373, %374 : vector<2x128xi32>
      %376 = arith.xori %371, %375 : vector<2x128xi32>
      %c73244475_i32_108 = arith.constant 73244475 : i32
      %377 = vector.broadcast %c73244475_i32_108 : i32 to vector<2x128xi32>
      %378 = arith.muli %376, %377 : vector<2x128xi32>
      %c16_i32_109 = arith.constant 16 : i32
      %379 = vector.broadcast %c16_i32_109 : i32 to vector<2x128xi32>
      %380 = arith.shrsi %378, %379 : vector<2x128xi32>
      %c65535_i32_110 = arith.constant 65535 : i32
      %381 = vector.broadcast %c65535_i32_110 : i32 to vector<2x128xi32>
      %382 = arith.andi %380, %381 : vector<2x128xi32>
      %383 = arith.xori %378, %382 : vector<2x128xi32>
      %c73244475_i32_111 = arith.constant 73244475 : i32
      %384 = vector.broadcast %c73244475_i32_111 : i32 to vector<2x128xi32>
      %385 = arith.muli %383, %384 : vector<2x128xi32>
      %c16_i32_112 = arith.constant 16 : i32
      %386 = vector.broadcast %c16_i32_112 : i32 to vector<2x128xi32>
      %387 = arith.shrsi %385, %386 : vector<2x128xi32>
      %c65535_i32_113 = arith.constant 65535 : i32
      %388 = vector.broadcast %c65535_i32_113 : i32 to vector<2x128xi32>
      %389 = arith.andi %387, %388 : vector<2x128xi32>
      %390 = arith.xori %385, %389 : vector<2x128xi32>
      %c8_i32_114 = arith.constant 8 : i32
      %391 = vector.broadcast %c8_i32_114 : i32 to vector<2x128xi32>
      %392 = arith.shrsi %367, %391 : vector<2x128xi32>
      %c16777215_i32_115 = arith.constant 16777215 : i32
      %393 = vector.broadcast %c16777215_i32_115 : i32 to vector<2x128xi32>
      %394 = arith.andi %392, %393 : vector<2x128xi32>
      %c8_i32_116 = arith.constant 8 : i32
      %395 = vector.broadcast %c8_i32_116 : i32 to vector<2x128xi32>
      %396 = arith.shrsi %390, %395 : vector<2x128xi32>
      %c16777215_i32_117 = arith.constant 16777215 : i32
      %397 = vector.broadcast %c16777215_i32_117 : i32 to vector<2x128xi32>
      %398 = arith.andi %396, %397 : vector<2x128xi32>
      %c1_i32_118 = arith.constant 1 : i32
      %399 = vector.broadcast %c1_i32_118 : i32 to vector<2x128xi32>
      %400 = arith.addi %394, %399 : vector<2x128xi32>
      %401 = arith.sitofp %400 : vector<2x128xi32> to vector<2x128xf32>
      %cst_119 = arith.constant 5.96046448E-8 : f32
      %402 = vector.broadcast %cst_119 : f32 to vector<2x128xf32>
      %403 = arith.mulf %401, %402 : vector<2x128xf32>
      %404 = arith.sitofp %398 : vector<2x128xi32> to vector<2x128xf32>
      %cst_120 = arith.constant 5.96046448E-8 : f32
      %405 = vector.broadcast %cst_120 : f32 to vector<2x128xf32>
      %406 = arith.mulf %404, %405 : vector<2x128xf32>
      %407 = math.log %403 : vector<2x128xf32>
      %cst_121 = arith.constant -2.000000e+00 : f32
      %408 = vector.broadcast %cst_121 : f32 to vector<2x128xf32>
      %409 = arith.mulf %408, %407 : vector<2x128xf32>
      %410 = math.sqrt %409 : vector<2x128xf32>
      %cst_122 = arith.constant 6.28318548 : f32
      %411 = vector.broadcast %cst_122 : f32 to vector<2x128xf32>
      %412 = arith.mulf %411, %406 : vector<2x128xf32>
      %413 = math.cos %412 : vector<2x128xf32>
      %414 = arith.mulf %410, %413 : vector<2x128xf32>
      %415 = math.sin %412 : vector<2x128xf32>
      %416 = arith.mulf %410, %415 : vector<2x128xf32>
      %417 = tpu.concatenate %414, %416 in 1 : vector<2x128xf32>, vector<2x128xf32> -> vector<2x256xf32>
      %418 = vector.broadcast %341 : f32 to vector<2x256xf32>
      %419 = arith.mulf %418, %417 : vector<2x256xf32>
      %420 = arith.addf %335, %419 : vector<2x256xf32>
      scf.yield %206, %313, %420 : vector<2x256xf32>, vector<2x256xf32>, vector<2x256xf32>
    }
    %c7_i32_7 = arith.constant 7 : i32
    %c0_8 = arith.constant 0 : index
    %12 = memref.load %arg2[%c0_8] : memref<8xf32, #tpu.memory_space<smem>>
    %c0_9 = arith.constant 0 : index
    %13 = memref.load %arg3[%c0_9] : memref<8xf32, #tpu.memory_space<smem>>
    %c0_10 = arith.constant 0 : index
    %14 = memref.load %arg5[%c0_10] : memref<9xf32, #tpu.memory_space<smem>>
    %15 = vector.broadcast %14 : f32 to vector<2x256xf32>
    %16 = arith.mulf %11#0, %15 : vector<2x256xf32>
    %c3 = arith.constant 3 : index
    %17 = memref.load %arg5[%c3] : memref<9xf32, #tpu.memory_space<smem>>
    %18 = vector.broadcast %17 : f32 to vector<2x256xf32>
    %19 = arith.mulf %11#1, %18 : vector<2x256xf32>
    %20 = arith.addf %16, %19 : vector<2x256xf32>
    %c6 = arith.constant 6 : index
    %21 = memref.load %arg5[%c6] : memref<9xf32, #tpu.memory_space<smem>>
    %22 = vector.broadcast %21 : f32 to vector<2x256xf32>
    %23 = arith.mulf %11#2, %22 : vector<2x256xf32>
    %24 = arith.addf %20, %23 : vector<2x256xf32>
    %c0_11 = arith.constant 0 : index
    %25 = memref.load %arg6[%c0_11] : memref<24xf32, #tpu.memory_space<smem>>
    %26 = vector.broadcast %25 : f32 to vector<2x256xf32>
    %27 = arith.addf %24, %26 : vector<2x256xf32>
    %28 = math.tanh %27 : vector<2x256xf32>
    %29 = vector.broadcast %12 : f32 to vector<2x256xf32>
    %30 = arith.mulf %29, %11#0 : vector<2x256xf32>
    %31 = vector.broadcast %13 : f32 to vector<2x256xf32>
    %32 = arith.mulf %31, %28 : vector<2x256xf32>
    %33 = arith.subf %30, %32 : vector<2x256xf32>
    %c1_12 = arith.constant 1 : index
    %34 = memref.load %arg5[%c1_12] : memref<9xf32, #tpu.memory_space<smem>>
    %35 = vector.broadcast %34 : f32 to vector<2x256xf32>
    %36 = arith.mulf %11#0, %35 : vector<2x256xf32>
    %c4 = arith.constant 4 : index
    %37 = memref.load %arg5[%c4] : memref<9xf32, #tpu.memory_space<smem>>
    %38 = vector.broadcast %37 : f32 to vector<2x256xf32>
    %39 = arith.mulf %11#1, %38 : vector<2x256xf32>
    %40 = arith.addf %36, %39 : vector<2x256xf32>
    %c7 = arith.constant 7 : index
    %41 = memref.load %arg5[%c7] : memref<9xf32, #tpu.memory_space<smem>>
    %42 = vector.broadcast %41 : f32 to vector<2x256xf32>
    %43 = arith.mulf %11#2, %42 : vector<2x256xf32>
    %44 = arith.addf %40, %43 : vector<2x256xf32>
    %c8 = arith.constant 8 : index
    %45 = memref.load %arg6[%c8] : memref<24xf32, #tpu.memory_space<smem>>
    %46 = vector.broadcast %45 : f32 to vector<2x256xf32>
    %47 = arith.addf %44, %46 : vector<2x256xf32>
    %48 = math.tanh %47 : vector<2x256xf32>
    %49 = vector.broadcast %12 : f32 to vector<2x256xf32>
    %50 = arith.mulf %49, %11#1 : vector<2x256xf32>
    %51 = vector.broadcast %13 : f32 to vector<2x256xf32>
    %52 = arith.mulf %51, %48 : vector<2x256xf32>
    %53 = arith.subf %50, %52 : vector<2x256xf32>
    %c2_13 = arith.constant 2 : index
    %54 = memref.load %arg5[%c2_13] : memref<9xf32, #tpu.memory_space<smem>>
    %55 = vector.broadcast %54 : f32 to vector<2x256xf32>
    %56 = arith.mulf %11#0, %55 : vector<2x256xf32>
    %c5 = arith.constant 5 : index
    %57 = memref.load %arg5[%c5] : memref<9xf32, #tpu.memory_space<smem>>
    %58 = vector.broadcast %57 : f32 to vector<2x256xf32>
    %59 = arith.mulf %11#1, %58 : vector<2x256xf32>
    %60 = arith.addf %56, %59 : vector<2x256xf32>
    %c8_14 = arith.constant 8 : index
    %61 = memref.load %arg5[%c8_14] : memref<9xf32, #tpu.memory_space<smem>>
    %62 = vector.broadcast %61 : f32 to vector<2x256xf32>
    %63 = arith.mulf %11#2, %62 : vector<2x256xf32>
    %64 = arith.addf %60, %63 : vector<2x256xf32>
    %c16 = arith.constant 16 : index
    %65 = memref.load %arg6[%c16] : memref<24xf32, #tpu.memory_space<smem>>
    %66 = vector.broadcast %65 : f32 to vector<2x256xf32>
    %67 = arith.addf %64, %66 : vector<2x256xf32>
    %68 = math.tanh %67 : vector<2x256xf32>
    %69 = vector.broadcast %12 : f32 to vector<2x256xf32>
    %70 = arith.mulf %69, %11#2 : vector<2x256xf32>
    %71 = vector.broadcast %13 : f32 to vector<2x256xf32>
    %72 = arith.mulf %71, %68 : vector<2x256xf32>
    %73 = arith.subf %70, %72 : vector<2x256xf32>
    %cst = arith.constant -1.000000e+00 : f32
    %cst_15 = arith.constant 1.000000e+00 : f32
    %74 = vector.broadcast %cst : f32 to vector<2x256xf32>
    %75 = arith.maximumf %74, %33 : vector<2x256xf32>
    %76 = vector.broadcast %cst_15 : f32 to vector<2x256xf32>
    %77 = arith.minimumf %76, %75 : vector<2x256xf32>
    %c0_16 = arith.constant 0 : index
    %c0_17 = arith.constant 0 : index
    %c0_18 = arith.constant 0 : index
    %78 = vector.load %arg10[%c0_16, %c0_17, %c0_18] : memref<3x2x256xf32, #tpu.memory_space<vmem>>, vector<1x2x256xf32>
    %79 = vector.shape_cast %78 : vector<1x2x256xf32> to vector<2x256xf32>
    %80 = vector.shape_cast %77 : vector<2x256xf32> to vector<1x2x256xf32>
    tpu.vector_store %arg10[%c0_16, %c0_17, %c0_18], %80 {strides = array<i32>} : memref<3x2x256xf32, #tpu.memory_space<vmem>>, vector<1x2x256xf32>,
    %cst_19 = arith.constant -1.000000e+00 : f32
    %cst_20 = arith.constant 1.000000e+00 : f32
    %81 = vector.broadcast %cst_19 : f32 to vector<2x256xf32>
    %82 = arith.maximumf %81, %53 : vector<2x256xf32>
    %83 = vector.broadcast %cst_20 : f32 to vector<2x256xf32>
    %84 = arith.minimumf %83, %82 : vector<2x256xf32>
    %c1_21 = arith.constant 1 : index
    %c0_22 = arith.constant 0 : index
    %c0_23 = arith.constant 0 : index
    %85 = vector.load %arg10[%c1_21, %c0_22, %c0_23] : memref<3x2x256xf32, #tpu.memory_space<vmem>>, vector<1x2x256xf32>
    %86 = vector.shape_cast %85 : vector<1x2x256xf32> to vector<2x256xf32>
    %87 = vector.shape_cast %84 : vector<2x256xf32> to vector<1x2x256xf32>
    tpu.vector_store %arg10[%c1_21, %c0_22, %c0_23], %87 {strides = array<i32>} : memref<3x2x256xf32, #tpu.memory_space<vmem>>, vector<1x2x256xf32>,
    %cst_24 = arith.constant -1.000000e+00 : f32
    %cst_25 = arith.constant 1.000000e+00 : f32
    %88 = vector.broadcast %cst_24 : f32 to vector<2x256xf32>
    %89 = arith.maximumf %88, %73 : vector<2x256xf32>
    %90 = vector.broadcast %cst_25 : f32 to vector<2x256xf32>
    %91 = arith.minimumf %90, %89 : vector<2x256xf32>
    %c2_26 = arith.constant 2 : index
    %c0_27 = arith.constant 0 : index
    %c0_28 = arith.constant 0 : index
    %92 = vector.load %arg10[%c2_26, %c0_27, %c0_28] : memref<3x2x256xf32, #tpu.memory_space<vmem>>, vector<1x2x256xf32>
    %93 = vector.shape_cast %92 : vector<1x2x256xf32> to vector<2x256xf32>
    %94 = vector.shape_cast %91 : vector<2x256xf32> to vector<1x2x256xf32>
    tpu.vector_store %arg10[%c2_26, %c0_27, %c0_28], %94 {strides = array<i32>} : memref<3x2x256xf32, #tpu.memory_space<vmem>>, vector<1x2x256xf32>,
    return
  }
  func.func @transform_0(%arg0: i32) -> i32 {
    %c0_i32 = arith.constant 0 : i32
    %c0_i32_0 = arith.constant 0 : i32
    return %c0_i32 : i32
  }
  func.func @transform_1(%arg0: i32) -> i32 {
    %c0_i32 = arith.constant 0 : i32
    %c0_i32_0 = arith.constant 0 : i32
    return %c0_i32 : i32
  }
  func.func @transform_2(%arg0: i32) -> i32 {
    %c0_i32 = arith.constant 0 : i32
    %c0_i32_0 = arith.constant 0 : i32
    return %c0_i32 : i32
  }
  func.func @transform_3(%arg0: i32) -> i32 {
    %c0_i32 = arith.constant 0 : i32
    %c0_i32_0 = arith.constant 0 : i32
    return %c0_i32 : i32
  }
  func.func @transform_4(%arg0: i32) -> i32 {
    %c0_i32 = arith.constant 0 : i32
    %c0_i32_0 = arith.constant 0 : i32
    return %c0_i32 : i32
  }
  func.func @transform_5(%arg0: i32) -> i32 {
    %c0_i32 = arith.constant 0 : i32
    %c0_i32_0 = arith.constant 0 : i32
    return %c0_i32 : i32
  }
  func.func @transform_6(%arg0: i32) -> i32 {
    %c0_i32 = arith.constant 0 : i32
    %c0_i32_0 = arith.constant 0 : i32
    return %c0_i32 : i32
  }
  func.func @transform_7(%arg0: i32) -> i32 {
    %c0_i32 = arith.constant 0 : i32
    %c0_i32_0 = arith.constant 0 : i32
    return %c0_i32 : i32
  }
  func.func @transform_8(%arg0: i32) -> (i32, i32, i32) {
    %c0_i32 = arith.constant 0 : i32
    %c0_i32_0 = arith.constant 0 : i32
    %c0_i32_1 = arith.constant 0 : i32
    return %c0_i32, %c0_i32_0, %arg0 : i32, i32, i32
  }
  func.func @transform_9(%arg0: i32) -> (i32, i32, i32) {
    %c0_i32 = arith.constant 0 : i32
    %c0_i32_0 = arith.constant 0 : i32
    %c0_i32_1 = arith.constant 0 : i32
    return %c0_i32, %c0_i32_0, %arg0 : i32, i32, i32
  }
}

</mosaic_0001>

<llo_original>
// kernel: tpu_custom_call.1
$region0: #{tpu_custom_call.1}
  #allocation0 [shape = 'u32[]', space=smem, size = 0x4, offset = 0x4, fixed_abs, tag = 'smem constant byte address 0x4 - core index']
  #allocation1 [shape = 'u32[144,128]{1,0:T(1,128)}', space=vmem, size = 0x12000, scoped, tag = 'internal scratch']
  #allocation2 [shape = 's32[1]{0:T(128)S(6)}', space=smem, size = 0x200, scoped, tag = 'scoped memory for tpu_custom_call.1']
  #allocation3 [shape = 'f32[1]{0:T(128)S(6)}', space=smem, size = 0x200, scoped, tag = 'scoped memory for tpu_custom_call.1']
  %s0 = inlined_call_operand.<no memory space> [shape: s32[1], index: 0, kind: input, shape index: {}]
  %s1 = inlined_call_operand.vmem [shape: f32[8], index: 1, kind: input, shape index: {}]
  %s2 = inlined_call_operand.vmem [shape: f32[8], index: 2, kind: input, shape index: {}]
  %s3 = inlined_call_operand.hbm [shape: f32[8], index: 3, kind: input, shape index: {}]
  %s4 = inlined_call_operand.hbm [shape: f32[9], index: 4, kind: input, shape index: {}]
  %s5 = inlined_call_operand.hbm [shape: f32[24], index: 5, kind: input, shape index: {}]
  %s6 = inlined_call_operand.hbm [shape: f32[3], index: 6, kind: input, shape index: {}]
  %s7 = inlined_call_operand.<no memory space> [shape: f32[1], index: 7, kind: input, shape index: {}]
  %s8 = inlined_call_operand.vmem [shape: f32[3,2,256], index: 8, kind: input, shape index: {}]
  %s9 = inlined_call_operand.hbm [shape: f32[3,2,256], index: 9, kind: output, shape index: {}]
  %s10 = sld [smem:[#allocation0]]
  $region77: #{tpu_custom_call.1} parent=0
    _
  %s12 = ssub.s32 1, %s10
  %s13 = scalar_select 0, %s12, %s10
  %14 = sst [smem:[#allocation2]] %s0
  %15 = sst [smem:[#allocation3]] %s7
  $region1: #{tpu_custom_call.1} parent=0
    #allocation4 [shape = 'u8[512]{0}', space=smem, size = 0x200, scoped, tag = 'input window, operand 1, single buffered']
    #allocation5 [shape = 's32[1]{0}', space=sflag, size = 0x4, scoped, tag = 'scoped memory for tpu_custom_call.1']
    #allocation6 [shape = 's32[1]{0}', space=sflag, size = 0x4, scoped, tag = 'scoped memory for tpu_custom_call.1']
    #allocation7 [shape = 's32[1]{0}', space=sflag, size = 0x4, scoped, tag = 'scoped memory for tpu_custom_call.1']
    #allocation8 [shape = 'u8[512]{0}', space=smem, size = 0x200, scoped, tag = 'input window, operand 2, single buffered']
    #allocation9 [shape = 's32[1]{0}', space=sflag, size = 0x4, scoped, tag = 'scoped memory for tpu_custom_call.1']
    #allocation10 [shape = 'u8[512]{0}', space=smem, size = 0x200, scoped, tag = 'input window, operand 3, single buffered']
    #allocation11 [shape = 'u8[512]{0}', space=smem, size = 0x200, scoped, tag = 'input window, operand 4, single buffered']
    #allocation12 [shape = 's32[1]{0}', space=sflag, size = 0x4, scoped, tag = 'scoped memory for tpu_custom_call.1']
    #allocation13 [shape = 'u8[512]{0}', space=smem, size = 0x200, scoped, tag = 'input window, operand 5, single buffered']
    #allocation14 [shape = 'u8[512]{0}', space=smem, size = 0x200, scoped, tag = 'input window, operand 6, single buffered']
    #allocation15 [shape = 's32[1]{0}', space=sflag, size = 0x4, scoped, tag = 'scoped memory for tpu_custom_call.1']
    #allocation16 [shape = 'u8[6144]{0}', space=vmem, size = 0x1800, scoped, tag = 'output window, operand 0, single buffered']
    %16 = vsyncpa [#allocation7], 0
    %17 = vsyncpa [#allocation9], 0
    %18 = vsyncpa [#allocation6], 0
    %19 = vsyncpa [#allocation12], 0
    %20 = vsyncpa [#allocation15], 0
    %21 = vsyncpa [#allocation5], 0
    // Predicated region
    $region2: #{tpu_custom_call.1} parent=1 // pred_check
      _
    $region3: #{tpu_custom_call.1} parent=1 // pred_check_branch
      %23 = sbr.rel (0) target = $region5
    $region4: #{tpu_custom_call.1} parent=1 // pred_region
      _
    $region5: #{tpu_custom_call.1} parent=1 // pred_fallthru
      _
    // Predicated region
    $region6: #{tpu_custom_call.1} parent=1 // pred_check
      _
    $region7: #{tpu_custom_call.1} parent=1 // pred_check_branch
      %25 = sbr.rel (0) target = $region9
    $region8: #{tpu_custom_call.1} parent=1 // pred_region
      %s27 = ssub.s32 16, 16
      %28 = vsyncadd [#allocation7], %s27
      %s30 = sshll.u32 %s1, 4
      %s31 = int_to_ptr.vmem [resolvable:$true] %s30
      %33 = dma.vmem_to_smem %s31, 16, [#allocation4], [#allocation7]
    $region9: #{tpu_custom_call.1} parent=1 // pred_fallthru
      _
    // Predicated region
    $region10: #{tpu_custom_call.1} parent=1 // pred_check
      _
    $region11: #{tpu_custom_call.1} parent=1 // pred_check_branch
      %35 = sbr.rel (0) target = $region13
    $region12: #{tpu_custom_call.1} parent=1 // pred_region
      %s37 = ssub.s32 16, 16
      %38 = vsyncadd [#allocation9], %s37
      %s40 = sshll.u32 %s2, 4
      %s41 = int_to_ptr.vmem [resolvable:$true] %s40
      %43 = dma.vmem_to_smem %s41, 16, [#allocation8], [#allocation9]
    $region13: #{tpu_custom_call.1} parent=1 // pred_fallthru
      _
    // Predicated region
    $region14: #{tpu_custom_call.1} parent=1 // pred_check
      _
    $region15: #{tpu_custom_call.1} parent=1 // pred_check_branch
      %45 = sbr.rel (0) target = $region17
    $region16: #{tpu_custom_call.1} parent=1 // pred_region
      %s47 = ssub.s32 16, 16
      %48 = vsyncadd [#allocation6], %s47
      %51 = dma.hbm_to_smem %s3, 16, [#allocation10], [#allocation6]
    $region17: #{tpu_custom_call.1} parent=1 // pred_fallthru
      _
    // Predicated region
    $region18: #{tpu_custom_call.1} parent=1 // pred_check
      _
    $region19: #{tpu_custom_call.1} parent=1 // pred_check_branch
      %53 = sbr.rel (0) target = $region21
    $region20: #{tpu_custom_call.1} parent=1 // pred_region
      %s55 = ssub.s32 16, 16
      %56 = vsyncadd [#allocation12], %s55
      %59 = dma.hbm_to_smem %s4, 16, [#allocation11], [#allocation12]
    $region21: #{tpu_custom_call.1} parent=1 // pred_fallthru
      _
    // Predicated region
    $region22: #{tpu_custom_call.1} parent=1 // pred_check
      _
    $region23: #{tpu_custom_call.1} parent=1 // pred_check_branch
      %61 = sbr.rel (0) target = $region25
    $region24: #{tpu_custom_call.1} parent=1 // pred_region
      %s63 = ssub.s32 16, 16
      %64 = vsyncadd [#allocation12], %s63
      %67 = dma.hbm_to_smem %s5, 16, [#allocation13], [#allocation12]
    $region25: #{tpu_custom_call.1} parent=1 // pred_fallthru
      _
    // Predicated region
    $region26: #{tpu_custom_call.1} parent=1 // pred_check
      _
    $region27: #{tpu_custom_call.1} parent=1 // pred_check_branch
      %69 = sbr.rel (0) target = $region29
    $region28: #{tpu_custom_call.1} parent=1 // pred_region
      %s71 = ssub.s32 16, 16
      %72 = vsyncadd [#allocation15], %s71
      %75 = dma.hbm_to_smem %s6, 16, [#allocation14], [#allocation15]
    $region29: #{tpu_custom_call.1} parent=1 // pred_fallthru
      _
    // Predicated region
    $region30: #{tpu_custom_call.1} parent=1 // pred_check
      _
    $region31: #{tpu_custom_call.1} parent=1 // pred_check_branch
      %77 = sbr.rel (0) target = $region33
    $region32: #{tpu_custom_call.1} parent=1 // pred_region
      _
    $region33: #{tpu_custom_call.1} parent=1 // pred_fallthru
      _
    // Predicated region
    $region34: #{tpu_custom_call.1} parent=1 // pred_check
      _
    $region35: #{tpu_custom_call.1} parent=1 // pred_check_branch
      %79 = sbr.rel (0) target = $region37
    $region36: #{tpu_custom_call.1} parent=1 // pred_region
      _
    $region37: #{tpu_custom_call.1} parent=1 // pred_fallthru
      _
    // Predicated region
    $region38: #{tpu_custom_call.1} parent=1 // pred_check
      _
    $region39: #{tpu_custom_call.1} parent=1 // pred_check_branch
      %81 = sbr.rel (0) target = $region41
    $region40: #{tpu_custom_call.1} parent=1 // pred_region
      %82 = dma.done [#allocation7], 16
    $region41: #{tpu_custom_call.1} parent=1 // pred_fallthru
      _
    // Predicated region
    $region42: #{tpu_custom_call.1} parent=1 // pred_check
      _
    $region43: #{tpu_custom_call.1} parent=1 // pred_check_branch
      %84 = sbr.rel (0) target = $region45
    $region44: #{tpu_custom_call.1} parent=1 // pred_region
      %85 = dma.done [#allocation9], 16
    $region45: #{tpu_custom_call.1} parent=1 // pred_fallthru
      _
    // Predicated region
    $region46: #{tpu_custom_call.1} parent=1 // pred_check
      _
    $region47: #{tpu_custom_call.1} parent=1 // pred_check_branch
      %87 = sbr.rel (0) target = $region49
    $region48: #{tpu_custom_call.1} parent=1 // pred_region
      %88 = dma.done [#allocation6], 16
    $region49: #{tpu_custom_call.1} parent=1 // pred_fallthru
      _
    // Predicated region
    $region50: #{tpu_custom_call.1} parent=1 // pred_check
      _
    $region51: #{tpu_custom_call.1} parent=1 // pred_check_branch
      %90 = sbr.rel (0) target = $region53
    $region52: #{tpu_custom_call.1} parent=1 // pred_region
      %91 = dma.done [#allocation12], 16
    $region53: #{tpu_custom_call.1} parent=1 // pred_fallthru
      _
    // Predicated region
    $region54: #{tpu_custom_call.1} parent=1 // pred_check
      _
    $region55: #{tpu_custom_call.1} parent=1 // pred_check_branch
      %93 = sbr.rel (0) target = $region57
    $region56: #{tpu_custom_call.1} parent=1 // pred_region
      %94 = dma.done [#allocation12], 16
    $region57: #{tpu_custom_call.1} parent=1 // pred_fallthru
      _
    // Predicated region
    $region58: #{tpu_custom_call.1} parent=1 // pred_check
      _
    $region59: #{tpu_custom_call.1} parent=1 // pred_check_branch
      %96 = sbr.rel (0) target = $region61
    $region60: #{tpu_custom_call.1} parent=1 // pred_region
      %97 = dma.done [#allocation15], 16
    $region61: #{tpu_custom_call.1} parent=1 // pred_fallthru
      _
    %98 = sfence
    %s99 = sld [smem:[#allocation2]]
    %s100 = smul.u32 %s99, 16777619
    %s101 = smul.u32 0, 512
    %s102 = sadd.s32 %s100, %s101
    %v103 = vld [vmem:[%s8] sm:$0xf]
    %s104 = scalar_lea.vmem %s8, 4
    %v105 = vld [vmem:[%s104] sm:$0xf]
    %s106 = scalar_lea.vmem %s8, 8
    %v107 = vld [vmem:[%s106] sm:$0xf]
    loop: start=0, step=1, limit=7
    $region62: #{tpu_custom_call.1} parent=1 // loop_pre_header
      _
    $region63: #{tpu_custom_call.1} parent=1 // loop_header
      %s109 = sphi 0, %s113
      %p110 = scmp.ge.s32.totalorder %s109, 7
      %v114 = vphi %v103, %v417
      %v115 = vphi %v105, %v708
      %v116 = vphi %v107, %v998
    $region64: #{tpu_custom_call.1} parent=1 // loop_header_branch
      %112 = sbr.rel (%p110) target = $region68
    $region65: #{tpu_custom_call.1} parent=1 // loop_body
      %s117 = ssub.s32 7, %s109
      %s118 = sld [smem:[#allocation4 + %s117]]
      %s119 = sld [smem:[#allocation8 + %s117]]
      %s120 = sld [smem:[#allocation11]]
      %v121 = vstv %s120
      %v122 = vmul.f32 %v114, %v121
      %s123 = sld [smem:[#allocation11 + $0x3]]
      %v124 = vstv %s123
      %v125 = vmul.f32 %v115, %v124
      %v126 = vadd.f32 %v122, %v125
      %s127 = sld [smem:[#allocation11 + $0x6]]
      %v128 = vstv %s127
      %v129 = vmul.f32 %v116, %v128
      %v130 = vadd.f32 %v126, %v129
      %s131 = sld [smem:[#allocation13 + %s117]]
      %v132 = vstv %s131
      %v133 = vadd.f32 %v130, %v132
      %v134 = vtanh.pop %v133
      %v135 = vstv %s118
      %v136 = vmul.f32 %v135, %v114
      %v137 = vstv %s119
      %v138 = vmul.f32 %v137, %v134
      %v139 = vsub.f32 %v136, %v138
      %s140 = smul.u32 %s117, 1536
      %s141 = sadd.s32 %s102, %s140
      %s142 = sld [smem:[#allocation10 + %s117]]
      %v143 = vlaneseq
      %v144 = vshrl.u32 %v143, 7
      %v145 = vlaneseq
      %v146 = vand.u32 %v145, 127
      %v147 = vmul.u32 %v144, 128
      %v148 = vadd.s32 %v147, %v146
      %v149 = vstv %s141
      %v150 = vadd.s32 %v148, %v149
      %v151 = vshra.s32 %v150, 16
      %v152 = vand.u32 %v151, 65535
      %v153 = vxor.u32 %v150, %v152
      %v154 = vmul.u32 %v153, 73244475
      %v155 = vshra.s32 %v154, 16
      %v156 = vand.u32 %v155, 65535
      %v157 = vxor.u32 %v154, %v156
      %v158 = vmul.u32 %v157, 73244475
      %v159 = vshra.s32 %v158, 16
      %v160 = vand.u32 %v159, 65535
      %v161 = vxor.u32 %v158, %v160
      %v162 = vadd.s32 %v150, 256
      %v163 = vshra.s32 %v162, 16
      %v164 = vand.u32 %v163, 65535
      %v165 = vxor.u32 %v162, %v164
      %v166 = vmul.u32 %v165, 73244475
      %v167 = vshra.s32 %v166, 16
      %v168 = vand.u32 %v167, 65535
      %v169 = vxor.u32 %v166, %v168
      %v170 = vmul.u32 %v169, 73244475
      %v171 = vshra.s32 %v170, 16
      %v172 = vand.u32 %v171, 65535
      %v173 = vxor.u32 %v170, %v172
      %v174 = vshra.s32 %v161, 8
      %v175 = vand.u32 %v174, 16777215
      %v176 = vshra.s32 %v173, 8
      %v177 = vand.u32 %v176, 16777215
      %v178 = vadd.s32 %v175, 1
      %v179 = vcvt.s32.f32 %v178
      %v180 = vmul.f32 %v179, 5.9604645e-08
      %v181 = vcvt.s32.f32 %v177
      %v182 = vmul.f32 %v181, 5.9604645e-08
      %v183 = vlog2.pop %v180
      %v184 = vmul.f32 %v183, 0.6931472
      %v185 = vmul.f32 %v184, -2.0
      %v186 = vrsqrt.pop %v185
      %v187 = vmul.f32 %v185, %v186
      %vm188 = vcmp.eq.f32.partialorder %v185, inf
      %v189 = vsel %vm188, %v185, %v187
      %vm190 = vcmp.eq.f32.partialorder %v185, 0.0
      %v191 = vand.u32 %v185, 2147483648
      %v192 = vsel %vm190, %v191, %v189
      %v193 = vmul.f32 %v182, 6.2831855
      %v194 = vand.u32 2147483647, %v193
      %vm195 = vcmp.le.f32.partialorder %v194, 0.7853982
      %vm196 = vcmp.lt.s32.totalorder %v193, 0
      %v197 = vand.u32 %v193, 2139095040
      %v198 = vshrl.u32 %v197, 23
      %v199 = vsub.s32 %v198, 127
      %v200 = vand.u32 2147483647, %v193
      %v201 = vand.u32 %v200, 8388607
      %v202 = vor.u32 %v201, 8388608
      %v203 = vsub.s32 0, %v202
      %v204 = vadd.s32 %v199, 1
      %vm205 = vcmp.gt.s32.totalorder %v204, 0
      %v206 = vsel %vm205, %v204, 0
      %v207 = vshrl.u32 %v206, 5
      %v208 = vand.u32 %v206, 31
      %v209 = vsub.s32 32, %v208
      %v210 = vshrl.u32 683565275, %v209
      %v211 = vshll.u32 683565275, %v208
      %v212 = vshrl.u32 2475754826, %v209
      %v213 = vor.u32 %v211, %v212
      %v214 = vshll.u32 2475754826, %v208
      %v215 = vshrl.u32 2131351028, %v209
      %v216 = vor.u32 %v214, %v215
      %v217 = vshll.u32 2131351028, %v208
      %v218 = vshrl.u32 2102212464, %v209
      %v219 = vor.u32 %v217, %v218
      %v220 = vshll.u32 2102212464, %v208
      %v221 = vshrl.u32 920167782, %v209
      %v222 = vor.u32 %v220, %v221
      %v223 = vshll.u32 920167782, %v208
      %v224 = vshrl.u32 1326507024, %v209
      %v225 = vor.u32 %v223, %v224
      %vm226 = vcmp.lt.s32.totalorder %v207, 1
      %vm227 = vcmp.lt.s32.totalorder %v207, 2
      %vm228 = vcmp.lt.s32.totalorder %v207, 3
      %vm229 = vcmp.lt.s32.totalorder %v207, 4
      %v230 = vsel %vm226, %v210, %v213
      %v231 = vsel %vm229, %v219, 2102212464
      %v232 = vsel %vm228, %v216, %v231
      %v233 = vsel %vm227, %v230, %v232
      %v234 = vsel %vm226, %v213, %v216
      %v235 = vsel %vm229, %v222, 920167782
      %v236 = vsel %vm228, %v219, %v235
      %v237 = vsel %vm227, %v234, %v236
      %v238 = vsel %vm226, %v216, %v219
      %v239 = vsel %vm229, %v225, 1326507024
      %v240 = vsel %vm228, %v222, %v239
      %v241 = vsel %vm227, %v238, %v240
      %v242 = vshll.u32 %v202, 8
      %v243 = vmul.u32.u64.compose %v242, %v241
      %v244 = vextract.low.u32 %v243
      %v245 = vextract.high.u32 %v243
      %v246 = vmul.u32.u64.compose %v242, %v237
      %v247 = vextract.low.u32 %v246
      %v248 = vextract.high.u32 %v246
      %v249 = vmul.u32 %v242, %v233
      %v250 = vadd.s32 %v245, %v247
      %vm251 = vc.u32 %v245, %v247
      %v252 = vadd.s32 %v248, 1
      %v253 = vsel %vm251, %v252, %v248
      %v254 = vadd.s32 %v249, %v253
      %v255 = vadd.s32 %v254, 536870912
      %v256 = vshrl.u32 %v255, 30
      %v257 = vshll.u32 %v256, 30
      %v258 = vsub.s32 %v254, %v257
      %vm259 = vcmp.lt.s32.totalorder %v258, 0
      %v260 = vsub.s32 0, %v258
      %v261 = vsel %vm259, %v260, %v258
      %v262 = vclz %v261
      %v263 = vsub.s32 %v262, 2
      %vm264 = vcmp.gt.s32.totalorder 0, %v263
      %v265 = vsel %vm264, 0, %v263
      %v266 = vsub.s32 32, %v265
      %v267 = vshll.u32 %v258, %v265
      %v268 = vshrl.u32 %v250, %v266
      %v269 = vor.u32 %v267, %v268
      %v270 = vsub.s32 4294967266, %v265
      %v271 = vadd.s32 %v270, 127
      %v272 = vshll.u32 %v271, 23
      %v273 = vor.u32 4788187, %v272
      %v274 = vand.u32 2147483647, %v273
      %v276 = vcvt.s32.f32 %v269
      %v277 = vmul.f32 %v276, %v274
      %v278 = vxor.u32 %v277, 2147483648
      %v279 = vsel %vm196, %v278, %v277
      %v280 = vsub.s32 4, %v256
      %v281 = vsel %vm196, %v280, %v256
      %v282 = vsel %vm195, %v193, %v279
      %v283 = vsel %vm195, 0, %v281
      %v284 = vcosq.f32.pop %v282
      %v285 = vsinq.f32.pop %v282
      %vm286 = vweird.f32 %v193
      %v287 = vand.u32 %v283, 3
      %vm288 = vcmp.lt.s32.totalorder %v287, 2
      %vm289 = vcmp.eq.s32.totalorder %v287, 0
      %v290 = vxor.u32 %v285, 2147483648
      %v291 = vsel %vm289, %v284, %v290
      %vm292 = vcmp.eq.s32.totalorder %v287, 2
      %v293 = vxor.u32 %v284, 2147483648
      %v294 = vsel %vm292, %v293, %v285
      %v295 = vsel %vm288, %v291, %v294
      %v296 = vsel %vm286, nan, %v295
      %v297 = vmul.f32 %v192, %v296
      %v298 = vand.u32 2147483647, %v193
      %vm299 = vcmp.le.f32.partialorder %v298, 0.7853982
      %vm300 = vcmp.lt.s32.totalorder %v193, 0
      %v301 = vand.u32 %v193, 2139095040
      %v302 = vshrl.u32 %v301, 23
      %v303 = vsub.s32 %v302, 127
      %v304 = vand.u32 2147483647, %v193
      %v305 = vand.u32 %v304, 8388607
      %v306 = vor.u32 %v305, 8388608
      %v307 = vsub.s32 0, %v306
      %v308 = vadd.s32 %v303, 1
      %vm309 = vcmp.gt.s32.totalorder %v308, 0
      %v310 = vsel %vm309, %v308, 0
      %v311 = vshrl.u32 %v310, 5
      %v312 = vand.u32 %v310, 31
      %v313 = vsub.s32 32, %v312
      %v314 = vshrl.u32 683565275, %v313
      %v315 = vshll.u32 683565275, %v312
      %v316 = vshrl.u32 2475754826, %v313
      %v317 = vor.u32 %v315, %v316
      %v318 = vshll.u32 2475754826, %v312
      %v319 = vshrl.u32 2131351028, %v313
      %v320 = vor.u32 %v318, %v319
      %v321 = vshll.u32 2131351028, %v312
      %v322 = vshrl.u32 2102212464, %v313
      %v323 = vor.u32 %v321, %v322
      %v324 = vshll.u32 2102212464, %v312
      %v325 = vshrl.u32 920167782, %v313
      %v326 = vor.u32 %v324, %v325
      %v327 = vshll.u32 920167782, %v312
      %v328 = vshrl.u32 1326507024, %v313
      %v329 = vor.u32 %v327, %v328
      %vm330 = vcmp.lt.s32.totalorder %v311, 1
      %vm331 = vcmp.lt.s32.totalorder %v311, 2
      %vm332 = vcmp.lt.s32.totalorder %v311, 3
      %vm333 = vcmp.lt.s32.totalorder %v311, 4
      %v334 = vsel %vm330, %v314, %v317
      %v335 = vsel %vm333, %v323, 2102212464
      %v336 = vsel %vm332, %v320, %v335
      %v337 = vsel %vm331, %v334, %v336
      %v338 = vsel %vm330, %v317, %v320
      %v339 = vsel %vm333, %v326, 920167782
      %v340 = vsel %vm332, %v323, %v339
      %v341 = vsel %vm331, %v338, %v340
      %v342 = vsel %vm330, %v320, %v323
      %v343 = vsel %vm333, %v329, 1326507024
      %v344 = vsel %vm332, %v326, %v343
      %v345 = vsel %vm331, %v342, %v344
      %v346 = vshll.u32 %v306, 8
      %v347 = vmul.u32.u64.compose %v346, %v345
      %v348 = vextract.low.u32 %v347
      %v349 = vextract.high.u32 %v347
      %v350 = vmul.u32.u64.compose %v346, %v341
      %v351 = vextract.low.u32 %v350
      %v352 = vextract.high.u32 %v350
      %v353 = vmul.u32 %v346, %v337
      %v354 = vadd.s32 %v349, %v351
      %vm355 = vc.u32 %v349, %v351
      %v356 = vadd.s32 %v352, 1
      %v357 = vsel %vm355, %v356, %v352
      %v358 = vadd.s32 %v353, %v357
      %v359 = vadd.s32 %v358, 536870912
      %v360 = vshrl.u32 %v359, 30
      %v361 = vshll.u32 %v360, 30
      %v362 = vsub.s32 %v358, %v361
      %vm363 = vcmp.lt.s32.totalorder %v362, 0
      %v364 = vsub.s32 0, %v362
      %v365 = vsel %vm363, %v364, %v362
      %v366 = vclz %v365
      %v367 = vsub.s32 %v366, 2
      %vm368 = vcmp.gt.s32.totalorder 0, %v367
      %v369 = vsel %vm368, 0, %v367
      %v370 = vsub.s32 32, %v369
      %v371 = vshll.u32 %v362, %v369
      %v372 = vshrl.u32 %v354, %v370
      %v373 = vor.u32 %v371, %v372
      %v374 = vsub.s32 4294967266, %v369
      %v375 = vadd.s32 %v374, 127
      %v376 = vshll.u32 %v375, 23
      %v377 = vor.u32 4788187, %v376
      %v378 = vand.u32 2147483647, %v377
      %v380 = vcvt.s32.f32 %v373
      %v381 = vmul.f32 %v380, %v378
      %v382 = vxor.u32 %v381, 2147483648
      %v383 = vsel %vm300, %v382, %v381
      %v384 = vsub.s32 4, %v360
      %v385 = vsel %vm300, %v384, %v360
      %v386 = vsel %vm299, %v193, %v383
      %v387 = vsel %vm299, 0, %v385
      %v388 = vcosq.f32.pop %v386
      %v389 = vsinq.f32.pop %v386
      %vm390 = vweird.f32 %v193
      %v391 = vadd.s32 %v387, 3
      %v392 = vand.u32 %v391, 3
      %vm393 = vcmp.lt.s32.totalorder %v392, 2
      %vm394 = vcmp.eq.s32.totalorder %v392, 0
      %v395 = vxor.u32 %v389, 2147483648
      %v396 = vsel %vm394, %v388, %v395
      %vm397 = vcmp.eq.s32.totalorder %v392, 2
      %v398 = vxor.u32 %v388, 2147483648
      %v399 = vsel %vm397, %v398, %v389
      %v400 = vsel %vm393, %v396, %v399
      %v401 = vsel %vm390, nan, %v400
      %v402 = vmul.f32 %v192, %v401
      %v403 = vstv %s142
      %v404 = vmul.f32 %v403, %v297
      %v405 = vmul.f32 %v403, %v402
      %v408 = vcombine.low %v404, %v405
      %v410 = vunpack.c.l.s4 1983009808
      %v411 = vunpack.c.0.s8 %v410
      %v412 = vlaneseq
      %v413 = vshrl.u32 %v412, 7
      %v414 = vsub.s32 %v411, %v413
      %v415 = vrot.slane %v408, %v414
      %v417 = vadd.f32 %v139, %v415
      %s418 = sld [smem:[#allocation11 + $0x1]]
      %v419 = vstv %s418
      %v420 = vmul.f32 %v114, %v419
      %s421 = sld [smem:[#allocation11 + $0x4]]
      %v422 = vstv %s421
      %v423 = vmul.f32 %v115, %v422
      %v424 = vadd.f32 %v420, %v423
      %s425 = sld [smem:[#allocation11 + $0x7]]
      %v426 = vstv %s425
      %v427 = vmul.f32 %v116, %v426
      %v428 = vadd.f32 %v424, %v427
      %s429 = ssub.s32 15, %s109
      %s430 = sld [smem:[#allocation13 + %s429]]
      %v431 = vstv %s430
      %v432 = vadd.f32 %v428, %v431
      %v433 = vtanh.pop %v432
      %v434 = vmul.f32 %v135, %v115
      %v435 = vmul.f32 %v137, %v433
      %v436 = vsub.f32 %v434, %v435
      %s437 = smul.u32 %s117, 3
      %s438 = sadd.s32 %s437, 1
      %s439 = smul.u32 %s438, 512
      %s440 = sadd.s32 %s102, %s439
      %v441 = vstv %s440
      %v442 = vadd.s32 %v148, %v441
      %v443 = vshra.s32 %v442, 16
      %v444 = vand.u32 %v443, 65535
      %v445 = vxor.u32 %v442, %v444
      %v446 = vmul.u32 %v445, 73244475
      %v447 = vshra.s32 %v446, 16
      %v448 = vand.u32 %v447, 65535
      %v449 = vxor.u32 %v446, %v448
      %v450 = vmul.u32 %v449, 73244475
      %v451 = vshra.s32 %v450, 16
      %v452 = vand.u32 %v451, 65535
      %v453 = vxor.u32 %v450, %v452
      %v454 = vadd.s32 %v442, 256
      %v455 = vshra.s32 %v454, 16
      %v456 = vand.u32 %v455, 65535
      %v457 = vxor.u32 %v454, %v456
      %v458 = vmul.u32 %v457, 73244475
      %v459 = vshra.s32 %v458, 16
      %v460 = vand.u32 %v459, 65535
      %v461 = vxor.u32 %v458, %v460
      %v462 = vmul.u32 %v461, 73244475
      %v463 = vshra.s32 %v462, 16
      %v464 = vand.u32 %v463, 65535
      %v465 = vxor.u32 %v462, %v464
      %v466 = vshra.s32 %v453, 8
      %v467 = vand.u32 %v466, 16777215
      %v468 = vshra.s32 %v465, 8
      %v469 = vand.u32 %v468, 16777215
      %v470 = vadd.s32 %v467, 1
      %v471 = vcvt.s32.f32 %v470
      %v472 = vmul.f32 %v471, 5.9604645e-08
      %v473 = vcvt.s32.f32 %v469
      %v474 = vmul.f32 %v473, 5.9604645e-08
      %v475 = vlog2.pop %v472
      %v476 = vmul.f32 %v475, 0.6931472
      %v477 = vmul.f32 %v476, -2.0
      %v478 = vrsqrt.pop %v477
      %v479 = vmul.f32 %v477, %v478
      %vm480 = vcmp.eq.f32.partialorder %v477, inf
      %v481 = vsel %vm480, %v477, %v479
      %vm482 = vcmp.eq.f32.partialorder %v477, 0.0
      %v483 = vand.u32 %v477, 2147483648
      %v484 = vsel %vm482, %v483, %v481
      %v485 = vmul.f32 %v474, 6.2831855
      %v486 = vand.u32 2147483647, %v485
      %vm487 = vcmp.le.f32.partialorder %v486, 0.7853982
      %vm488 = vcmp.lt.s32.totalorder %v485, 0
      %v489 = vand.u32 %v485, 2139095040
      %v490 = vshrl.u32 %v489, 23
      %v491 = vsub.s32 %v490, 127
      %v492 = vand.u32 2147483647, %v485
      %v493 = vand.u32 %v492, 8388607
      %v494 = vor.u32 %v493, 8388608
      %v495 = vsub.s32 0, %v494
      %v496 = vadd.s32 %v491, 1
      %vm497 = vcmp.gt.s32.totalorder %v496, 0
      %v498 = vsel %vm497, %v496, 0
      %v499 = vshrl.u32 %v498, 5
      %v500 = vand.u32 %v498, 31
      %v501 = vsub.s32 32, %v500
      %v502 = vshrl.u32 683565275, %v501
      %v503 = vshll.u32 683565275, %v500
      %v504 = vshrl.u32 2475754826, %v501
      %v505 = vor.u32 %v503, %v504
      %v506 = vshll.u32 2475754826, %v500
      %v507 = vshrl.u32 2131351028, %v501
      %v508 = vor.u32 %v506, %v507
      %v509 = vshll.u32 2131351028, %v500
      %v510 = vshrl.u32 2102212464, %v501
      %v511 = vor.u32 %v509, %v510
      %v512 = vshll.u32 2102212464, %v500
      %v513 = vshrl.u32 920167782, %v501
      %v514 = vor.u32 %v512, %v513
      %v515 = vshll.u32 920167782, %v500
      %v516 = vshrl.u32 1326507024, %v501
      %v517 = vor.u32 %v515, %v516
      %vm518 = vcmp.lt.s32.totalorder %v499, 1
      %vm519 = vcmp.lt.s32.totalorder %v499, 2
      %vm520 = vcmp.lt.s32.totalorder %v499, 3
      %vm521 = vcmp.lt.s32.totalorder %v499, 4
      %v522 = vsel %vm518, %v502, %v505
      %v523 = vsel %vm521, %v511, 2102212464
      %v524 = vsel %vm520, %v508, %v523
      %v525 = vsel %vm519, %v522, %v524
      %v526 = vsel %vm518, %v505, %v508
      %v527 = vsel %vm521, %v514, 920167782
      %v528 = vsel %vm520, %v511, %v527
      %v529 = vsel %vm519, %v526, %v528
      %v530 = vsel %vm518, %v508, %v511
      %v531 = vsel %vm521, %v517, 1326507024
      %v532 = vsel %vm520, %v514, %v531
      %v533 = vsel %vm519, %v530, %v532
      %v534 = vshll.u32 %v494, 8
      %v535 = vmul.u32.u64.compose %v534, %v533
      %v536 = vextract.low.u32 %v535
      %v537 = vextract.high.u32 %v535
      %v538 = vmul.u32.u64.compose %v534, %v529
      %v539 = vextract.low.u32 %v538
      %v540 = vextract.high.u32 %v538
      %v541 = vmul.u32 %v534, %v525
      %v542 = vadd.s32 %v537, %v539
      %vm543 = vc.u32 %v537, %v539
      %v544 = vadd.s32 %v540, 1
      %v545 = vsel %vm543, %v544, %v540
      %v546 = vadd.s32 %v541, %v545
      %v547 = vadd.s32 %v546, 536870912
      %v548 = vshrl.u32 %v547, 30
      %v549 = vshll.u32 %v548, 30
      %v550 = vsub.s32 %v546, %v549
      %vm551 = vcmp.lt.s32.totalorder %v550, 0
      %v552 = vsub.s32 0, %v550
      %v553 = vsel %vm551, %v552, %v550
      %v554 = vclz %v553
      %v555 = vsub.s32 %v554, 2
      %vm556 = vcmp.gt.s32.totalorder 0, %v555
      %v557 = vsel %vm556, 0, %v555
      %v558 = vsub.s32 32, %v557
      %v559 = vshll.u32 %v550, %v557
      %v560 = vshrl.u32 %v542, %v558
      %v561 = vor.u32 %v559, %v560
      %v562 = vsub.s32 4294967266, %v557
      %v563 = vadd.s32 %v562, 127
      %v564 = vshll.u32 %v563, 23
      %v565 = vor.u32 4788187, %v564
      %v566 = vand.u32 2147483647, %v565
      %v568 = vcvt.s32.f32 %v561
      %v569 = vmul.f32 %v568, %v566
      %v570 = vxor.u32 %v569, 2147483648
      %v571 = vsel %vm488, %v570, %v569
      %v572 = vsub.s32 4, %v548
      %v573 = vsel %vm488, %v572, %v548
      %v574 = vsel %vm487, %v485, %v571
      %v575 = vsel %vm487, 0, %v573
      %v576 = vcosq.f32.pop %v574
      %v577 = vsinq.f32.pop %v574
      %vm578 = vweird.f32 %v485
      %v579 = vand.u32 %v575, 3
      %vm580 = vcmp.lt.s32.totalorder %v579, 2
      %vm581 = vcmp.eq.s32.totalorder %v579, 0
      %v582 = vxor.u32 %v577, 2147483648
      %v583 = vsel %vm581, %v576, %v582
      %vm584 = vcmp.eq.s32.totalorder %v579, 2
      %v585 = vxor.u32 %v576, 2147483648
      %v586 = vsel %vm584, %v585, %v577
      %v587 = vsel %vm580, %v583, %v586
      %v588 = vsel %vm578, nan, %v587
      %v589 = vmul.f32 %v484, %v588
      %v590 = vand.u32 2147483647, %v485
      %vm591 = vcmp.le.f32.partialorder %v590, 0.7853982
      %vm592 = vcmp.lt.s32.totalorder %v485, 0
      %v593 = vand.u32 %v485, 2139095040
      %v594 = vshrl.u32 %v593, 23
      %v595 = vsub.s32 %v594, 127
      %v596 = vand.u32 2147483647, %v485
      %v597 = vand.u32 %v596, 8388607
      %v598 = vor.u32 %v597, 8388608
      %v599 = vsub.s32 0, %v598
      %v600 = vadd.s32 %v595, 1
      %vm601 = vcmp.gt.s32.totalorder %v600, 0
      %v602 = vsel %vm601, %v600, 0
      %v603 = vshrl.u32 %v602, 5
      %v604 = vand.u32 %v602, 31
      %v605 = vsub.s32 32, %v604
      %v606 = vshrl.u32 683565275, %v605
      %v607 = vshll.u32 683565275, %v604
      %v608 = vshrl.u32 2475754826, %v605
      %v609 = vor.u32 %v607, %v608
      %v610 = vshll.u32 2475754826, %v604
      %v611 = vshrl.u32 2131351028, %v605
      %v612 = vor.u32 %v610, %v611
      %v613 = vshll.u32 2131351028, %v604
      %v614 = vshrl.u32 2102212464, %v605
      %v615 = vor.u32 %v613, %v614
      %v616 = vshll.u32 2102212464, %v604
      %v617 = vshrl.u32 920167782, %v605
      %v618 = vor.u32 %v616, %v617
      %v619 = vshll.u32 920167782, %v604
      %v620 = vshrl.u32 1326507024, %v605
      %v621 = vor.u32 %v619, %v620
      %vm622 = vcmp.lt.s32.totalorder %v603, 1
      %vm623 = vcmp.lt.s32.totalorder %v603, 2
      %vm624 = vcmp.lt.s32.totalorder %v603, 3
      %vm625 = vcmp.lt.s32.totalorder %v603, 4
      %v626 = vsel %vm622, %v606, %v609
      %v627 = vsel %vm625, %v615, 2102212464
      %v628 = vsel %vm624, %v612, %v627
      %v629 = vsel %vm623, %v626, %v628
      %v630 = vsel %vm622, %v609, %v612
      %v631 = vsel %vm625, %v618, 920167782
      %v632 = vsel %vm624, %v615, %v631
      %v633 = vsel %vm623, %v630, %v632
      %v634 = vsel %vm622, %v612, %v615
      %v635 = vsel %vm625, %v621, 1326507024
      %v636 = vsel %vm624, %v618, %v635
      %v637 = vsel %vm623, %v634, %v636
      %v638 = vshll.u32 %v598, 8
      %v639 = vmul.u32.u64.compose %v638, %v637
      %v640 = vextract.low.u32 %v639
      %v641 = vextract.high.u32 %v639
      %v642 = vmul.u32.u64.compose %v638, %v633
      %v643 = vextract.low.u32 %v642
      %v644 = vextract.high.u32 %v642
      %v645 = vmul.u32 %v638, %v629
      %v646 = vadd.s32 %v641, %v643
      %vm647 = vc.u32 %v641, %v643
      %v648 = vadd.s32 %v644, 1
      %v649 = vsel %vm647, %v648, %v644
      %v650 = vadd.s32 %v645, %v649
      %v651 = vadd.s32 %v650, 536870912
      %v652 = vshrl.u32 %v651, 30
      %v653 = vshll.u32 %v652, 30
      %v654 = vsub.s32 %v650, %v653
      %vm655 = vcmp.lt.s32.totalorder %v654, 0
      %v656 = vsub.s32 0, %v654
      %v657 = vsel %vm655, %v656, %v654
      %v658 = vclz %v657
      %v659 = vsub.s32 %v658, 2
      %vm660 = vcmp.gt.s32.totalorder 0, %v659
      %v661 = vsel %vm660, 0, %v659
      %v662 = vsub.s32 32, %v661
      %v663 = vshll.u32 %v654, %v661
      %v664 = vshrl.u32 %v646, %v662
      %v665 = vor.u32 %v663, %v664
      %v666 = vsub.s32 4294967266, %v661
      %v667 = vadd.s32 %v666, 127
      %v668 = vshll.u32 %v667, 23
      %v669 = vor.u32 4788187, %v668
      %v670 = vand.u32 2147483647, %v669
      %v672 = vcvt.s32.f32 %v665
      %v673 = vmul.f32 %v672, %v670
      %v674 = vxor.u32 %v673, 2147483648
      %v675 = vsel %vm592, %v674, %v673
      %v676 = vsub.s32 4, %v652
      %v677 = vsel %vm592, %v676, %v652
      %v678 = vsel %vm591, %v485, %v675
      %v679 = vsel %vm591, 0, %v677
      %v680 = vcosq.f32.pop %v678
      %v681 = vsinq.f32.pop %v678
      %vm682 = vweird.f32 %v485
      %v683 = vadd.s32 %v679, 3
      %v684 = vand.u32 %v683, 3
      %vm685 = vcmp.lt.s32.totalorder %v684, 2
      %vm686 = vcmp.eq.s32.totalorder %v684, 0
      %v687 = vxor.u32 %v681, 2147483648
      %v688 = vsel %vm686, %v680, %v687
      %vm689 = vcmp.eq.s32.totalorder %v684, 2
      %v690 = vxor.u32 %v680, 2147483648
      %v691 = vsel %vm689, %v690, %v681
      %v692 = vsel %vm685, %v688, %v691
      %v693 = vsel %vm682, nan, %v692
      %v694 = vmul.f32 %v484, %v693
      %v695 = vmul.f32 %v403, %v589
      %v696 = vmul.f32 %v403, %v694
      %v699 = vcombine.low %v695, %v696
      %v701 = vunpack.c.l.s4 1983009808
      %v702 = vunpack.c.0.s8 %v701
      %v703 = vlaneseq
      %v704 = vshrl.u32 %v703, 7
      %v705 = vsub.s32 %v702, %v704
      %v706 = vrot.slane %v699, %v705
      %v708 = vadd.f32 %v436, %v706
      %s709 = sld [smem:[#allocation11 + $0x2]]
      %v710 = vstv %s709
      %v711 = vmul.f32 %v114, %v710
      %s712 = sld [smem:[#allocation11 + $0x5]]
      %v713 = vstv %s712
      %v714 = vmul.f32 %v115, %v713
      %v715 = vadd.f32 %v711, %v714
      %s716 = sld [smem:[#allocation11 + $0x8]]
      %v717 = vstv %s716
      %v718 = vmul.f32 %v116, %v717
      %v719 = vadd.f32 %v715, %v718
      %s720 = ssub.s32 23, %s109
      %s721 = sld [smem:[#allocation13 + %s720]]
      %v722 = vstv %s721
      %v723 = vadd.f32 %v719, %v722
      %v724 = vtanh.pop %v723
      %v725 = vmul.f32 %v135, %v116
      %v726 = vmul.f32 %v137, %v724
      %v727 = vsub.f32 %v725, %v726
      %s728 = sadd.s32 %s437, 2
      %s729 = smul.u32 %s728, 512
      %s730 = sadd.s32 %s102, %s729
      %v731 = vstv %s730
      %v732 = vadd.s32 %v148, %v731
      %v733 = vshra.s32 %v732, 16
      %v734 = vand.u32 %v733, 65535
      %v735 = vxor.u32 %v732, %v734
      %v736 = vmul.u32 %v735, 73244475
      %v737 = vshra.s32 %v736, 16
      %v738 = vand.u32 %v737, 65535
      %v739 = vxor.u32 %v736, %v738
      %v740 = vmul.u32 %v739, 73244475
      %v741 = vshra.s32 %v740, 16
      %v742 = vand.u32 %v741, 65535
      %v743 = vxor.u32 %v740, %v742
      %v744 = vadd.s32 %v732, 256
      %v745 = vshra.s32 %v744, 16
      %v746 = vand.u32 %v745, 65535
      %v747 = vxor.u32 %v744, %v746
      %v748 = vmul.u32 %v747, 73244475
      %v749 = vshra.s32 %v748, 16
      %v750 = vand.u32 %v749, 65535
      %v751 = vxor.u32 %v748, %v750
      %v752 = vmul.u32 %v751, 73244475
      %v753 = vshra.s32 %v752, 16
      %v754 = vand.u32 %v753, 65535
      %v755 = vxor.u32 %v752, %v754
      %v756 = vshra.s32 %v743, 8
      %v757 = vand.u32 %v756, 16777215
      %v758 = vshra.s32 %v755, 8
      %v759 = vand.u32 %v758, 16777215
      %v760 = vadd.s32 %v757, 1
      %v761 = vcvt.s32.f32 %v760
      %v762 = vmul.f32 %v761, 5.9604645e-08
      %v763 = vcvt.s32.f32 %v759
      %v764 = vmul.f32 %v763, 5.9604645e-08
      %v765 = vlog2.pop %v762
      %v766 = vmul.f32 %v765, 0.6931472
      %v767 = vmul.f32 %v766, -2.0
      %v768 = vrsqrt.pop %v767
      %v769 = vmul.f32 %v767, %v768
      %vm770 = vcmp.eq.f32.partialorder %v767, inf
      %v771 = vsel %vm770, %v767, %v769
      %vm772 = vcmp.eq.f32.partialorder %v767, 0.0
      %v773 = vand.u32 %v767, 2147483648
      %v774 = vsel %vm772, %v773, %v771
      %v775 = vmul.f32 %v764, 6.2831855
      %v776 = vand.u32 2147483647, %v775
      %vm777 = vcmp.le.f32.partialorder %v776, 0.7853982
      %vm778 = vcmp.lt.s32.totalorder %v775, 0
      %v779 = vand.u32 %v775, 2139095040
      %v780 = vshrl.u32 %v779, 23
      %v781 = vsub.s32 %v780, 127
      %v782 = vand.u32 2147483647, %v775
      %v783 = vand.u32 %v782, 8388607
      %v784 = vor.u32 %v783, 8388608
      %v785 = vsub.s32 0, %v784
      %v786 = vadd.s32 %v781, 1
      %vm787 = vcmp.gt.s32.totalorder %v786, 0
      %v788 = vsel %vm787, %v786, 0
      %v789 = vshrl.u32 %v788, 5
      %v790 = vand.u32 %v788, 31
      %v791 = vsub.s32 32, %v790
      %v792 = vshrl.u32 683565275, %v791
      %v793 = vshll.u32 683565275, %v790
      %v794 = vshrl.u32 2475754826, %v791
      %v795 = vor.u32 %v793, %v794
      %v796 = vshll.u32 2475754826, %v790
      %v797 = vshrl.u32 2131351028, %v791
      %v798 = vor.u32 %v796, %v797
      %v799 = vshll.u32 2131351028, %v790
      %v800 = vshrl.u32 2102212464, %v791
      %v801 = vor.u32 %v799, %v800
      %v802 = vshll.u32 2102212464, %v790
      %v803 = vshrl.u32 920167782, %v791
      %v804 = vor.u32 %v802, %v803
      %v805 = vshll.u32 920167782, %v790
      %v806 = vshrl.u32 1326507024, %v791
      %v807 = vor.u32 %v805, %v806
      %vm808 = vcmp.lt.s32.totalorder %v789, 1
      %vm809 = vcmp.lt.s32.totalorder %v789, 2
      %vm810 = vcmp.lt.s32.totalorder %v789, 3
      %vm811 = vcmp.lt.s32.totalorder %v789, 4
      %v812 = vsel %vm808, %v792, %v795
      %v813 = vsel %vm811, %v801, 2102212464
      %v814 = vsel %vm810, %v798, %v813
      %v815 = vsel %vm809, %v812, %v814
      %v816 = vsel %vm808, %v795, %v798
      %v817 = vsel %vm811, %v804, 920167782
      %v818 = vsel %vm810, %v801, %v817
      %v819 = vsel %vm809, %v816, %v818
      %v820 = vsel %vm808, %v798, %v801
      %v821 = vsel %vm811, %v807, 1326507024
      %v822 = vsel %vm810, %v804, %v821
      %v823 = vsel %vm809, %v820, %v822
      %v824 = vshll.u32 %v784, 8
      %v825 = vmul.u32.u64.compose %v824, %v823
      %v826 = vextract.low.u32 %v825
      %v827 = vextract.high.u32 %v825
      %v828 = vmul.u32.u64.compose %v824, %v819
      %v829 = vextract.low.u32 %v828
      %v830 = vextract.high.u32 %v828
      %v831 = vmul.u32 %v824, %v815
      %v832 = vadd.s32 %v827, %v829
      %vm833 = vc.u32 %v827, %v829
      %v834 = vadd.s32 %v830, 1
      %v835 = vsel %vm833, %v834, %v830
      %v836 = vadd.s32 %v831, %v835
      %v837 = vadd.s32 %v836, 536870912
      %v838 = vshrl.u32 %v837, 30
      %v839 = vshll.u32 %v838, 30
      %v840 = vsub.s32 %v836, %v839
      %vm841 = vcmp.lt.s32.totalorder %v840, 0
      %v842 = vsub.s32 0, %v840
      %v843 = vsel %vm841, %v842, %v840
      %v844 = vclz %v843
      %v845 = vsub.s32 %v844, 2
      %vm846 = vcmp.gt.s32.totalorder 0, %v845
      %v847 = vsel %vm846, 0, %v845
      %v848 = vsub.s32 32, %v847
      %v849 = vshll.u32 %v840, %v847
      %v850 = vshrl.u32 %v832, %v848
      %v851 = vor.u32 %v849, %v850
      %v852 = vsub.s32 4294967266, %v847
      %v853 = vadd.s32 %v852, 127
      %v854 = vshll.u32 %v853, 23
      %v855 = vor.u32 4788187, %v854
      %v856 = vand.u32 2147483647, %v855
      %v858 = vcvt.s32.f32 %v851
      %v859 = vmul.f32 %v858, %v856
      %v860 = vxor.u32 %v859, 2147483648
      %v861 = vsel %vm778, %v860, %v859
      %v862 = vsub.s32 4, %v838
      %v863 = vsel %vm778, %v862, %v838
      %v864 = vsel %vm777, %v775, %v861
      %v865 = vsel %vm777, 0, %v863
      %v866 = vcosq.f32.pop %v864
      %v867 = vsinq.f32.pop %v864
      %vm868 = vweird.f32 %v775
      %v869 = vand.u32 %v865, 3
      %vm870 = vcmp.lt.s32.totalorder %v869, 2
      %vm871 = vcmp.eq.s32.totalorder %v869, 0
      %v872 = vxor.u32 %v867, 2147483648
      %v873 = vsel %vm871, %v866, %v872
      %vm874 = vcmp.eq.s32.totalorder %v869, 2
      %v875 = vxor.u32 %v866, 2147483648
      %v876 = vsel %vm874, %v875, %v867
      %v877 = vsel %vm870, %v873, %v876
      %v878 = vsel %vm868, nan, %v877
      %v879 = vmul.f32 %v774, %v878
      %v880 = vand.u32 2147483647, %v775
      %vm881 = vcmp.le.f32.partialorder %v880, 0.7853982
      %vm882 = vcmp.lt.s32.totalorder %v775, 0
      %v883 = vand.u32 %v775, 2139095040
      %v884 = vshrl.u32 %v883, 23
      %v885 = vsub.s32 %v884, 127
      %v886 = vand.u32 2147483647, %v775
      %v887 = vand.u32 %v886, 8388607
      %v888 = vor.u32 %v887, 8388608
      %v889 = vsub.s32 0, %v888
      %v890 = vadd.s32 %v885, 1
      %vm891 = vcmp.gt.s32.totalorder %v890, 0
      %v892 = vsel %vm891, %v890, 0
      %v893 = vshrl.u32 %v892, 5
      %v894 = vand.u32 %v892, 31
      %v895 = vsub.s32 32, %v894
      %v896 = vshrl.u32 683565275, %v895
      %v897 = vshll.u32 683565275, %v894
      %v898 = vshrl.u32 2475754826, %v895
      %v899 = vor.u32 %v897, %v898
      %v900 = vshll.u32 2475754826, %v894
      %v901 = vshrl.u32 2131351028, %v895
      %v902 = vor.u32 %v900, %v901
      %v903 = vshll.u32 2131351028, %v894
      %v904 = vshrl.u32 2102212464, %v895
      %v905 = vor.u32 %v903, %v904
      %v906 = vshll.u32 2102212464, %v894
      %v907 = vshrl.u32 920167782, %v895
      %v908 = vor.u32 %v906, %v907
      %v909 = vshll.u32 920167782, %v894
      %v910 = vshrl.u32 1326507024, %v895
      %v911 = vor.u32 %v909, %v910
      %vm912 = vcmp.lt.s32.totalorder %v893, 1
      %vm913 = vcmp.lt.s32.totalorder %v893, 2
      %vm914 = vcmp.lt.s32.totalorder %v893, 3
      %vm915 = vcmp.lt.s32.totalorder %v893, 4
      %v916 = vsel %vm912, %v896, %v899
      %v917 = vsel %vm915, %v905, 2102212464
      %v918 = vsel %vm914, %v902, %v917
      %v919 = vsel %vm913, %v916, %v918
      %v920 = vsel %vm912, %v899, %v902
      %v921 = vsel %vm915, %v908, 920167782
      %v922 = vsel %vm914, %v905, %v921
      %v923 = vsel %vm913, %v920, %v922
      %v924 = vsel %vm912, %v902, %v905
      %v925 = vsel %vm915, %v911, 1326507024
      %v926 = vsel %vm914, %v908, %v925
      %v927 = vsel %vm913, %v924, %v926
      %v928 = vshll.u32 %v888, 8
      %v929 = vmul.u32.u64.compose %v928, %v927
      %v930 = vextract.low.u32 %v929
      %v931 = vextract.high.u32 %v929
      %v932 = vmul.u32.u64.compose %v928, %v923
      %v933 = vextract.low.u32 %v932
      %v934 = vextract.high.u32 %v932
      %v935 = vmul.u32 %v928, %v919
      %v936 = vadd.s32 %v931, %v933
      %vm937 = vc.u32 %v931, %v933
      %v938 = vadd.s32 %v934, 1
      %v939 = vsel %vm937, %v938, %v934
      %v940 = vadd.s32 %v935, %v939
      %v941 = vadd.s32 %v940, 536870912
      %v942 = vshrl.u32 %v941, 30
      %v943 = vshll.u32 %v942, 30
      %v944 = vsub.s32 %v940, %v943
      %vm945 = vcmp.lt.s32.totalorder %v944, 0
      %v946 = vsub.s32 0, %v944
      %v947 = vsel %vm945, %v946, %v944
      %v948 = vclz %v947
      %v949 = vsub.s32 %v948, 2
      %vm950 = vcmp.gt.s32.totalorder 0, %v949
      %v951 = vsel %vm950, 0, %v949
      %v952 = vsub.s32 32, %v951
      %v953 = vshll.u32 %v944, %v951
      %v954 = vshrl.u32 %v936, %v952
      %v955 = vor.u32 %v953, %v954
      %v956 = vsub.s32 4294967266, %v951
      %v957 = vadd.s32 %v956, 127
      %v958 = vshll.u32 %v957, 23
      %v959 = vor.u32 4788187, %v958
      %v960 = vand.u32 2147483647, %v959
      %v962 = vcvt.s32.f32 %v955
      %v963 = vmul.f32 %v962, %v960
      %v964 = vxor.u32 %v963, 2147483648
      %v965 = vsel %vm882, %v964, %v963
      %v966 = vsub.s32 4, %v942
      %v967 = vsel %vm882, %v966, %v942
      %v968 = vsel %vm881, %v775, %v965
      %v969 = vsel %vm881, 0, %v967
      %v970 = vcosq.f32.pop %v968
      %v971 = vsinq.f32.pop %v968
      %vm972 = vweird.f32 %v775
      %v973 = vadd.s32 %v969, 3
      %v974 = vand.u32 %v973, 3
      %vm975 = vcmp.lt.s32.totalorder %v974, 2
      %vm976 = vcmp.eq.s32.totalorder %v974, 0
      %v977 = vxor.u32 %v971, 2147483648
      %v978 = vsel %vm976, %v970, %v977
      %vm979 = vcmp.eq.s32.totalorder %v974, 2
      %v980 = vxor.u32 %v970, 2147483648
      %v981 = vsel %vm979, %v980, %v971
      %v982 = vsel %vm975, %v978, %v981
      %v983 = vsel %vm972, nan, %v982
      %v984 = vmul.f32 %v774, %v983
      %v985 = vmul.f32 %v403, %v879
      %v986 = vmul.f32 %v403, %v984
      %v989 = vcombine.low %v985, %v986
      %v991 = vunpack.c.l.s4 1983009808
      %v992 = vunpack.c.0.s8 %v991
      %v993 = vlaneseq
      %v994 = vshrl.u32 %v993, 7
      %v995 = vsub.s32 %v992, %v994
      %v996 = vrot.slane %v989, %v995
      %v998 = vadd.f32 %v727, %v996
    $region66: #{tpu_custom_call.1} parent=1 // loop_footer
      %s113 = sadd.s32 1, %s109
    $region67: #{tpu_custom_call.1} parent=1 // loop_footer_branch
      %108 = sbr.rel target = $region63
    $region68: #{tpu_custom_call.1} parent=1 // loop_exit
      _
    %s999 = sld [smem:[#allocation4]]
    %s1000 = sld [smem:[#allocation8]]
    %s1001 = sld [smem:[#allocation11]]
    %v1002 = vstv %s1001
    %v1003 = vmul.f32 %v114, %v1002
    %s1004 = sld [smem:[#allocation11 + $0x3]]
    %v1005 = vstv %s1004
    %v1006 = vmul.f32 %v115, %v1005
    %v1007 = vadd.f32 %v1003, %v1006
    %s1008 = sld [smem:[#allocation11 + $0x6]]
    %v1009 = vstv %s1008
    %v1010 = vmul.f32 %v116, %v1009
    %v1011 = vadd.f32 %v1007, %v1010
    %s1012 = sld [smem:[#allocation13]]
    %v1013 = vstv %s1012
    %v1014 = vadd.f32 %v1011, %v1013
    %v1015 = vtanh.pop %v1014
    %v1016 = vstv %s999
    %v1017 = vmul.f32 %v1016, %v114
    %v1018 = vstv %s1000
    %v1019 = vmul.f32 %v1018, %v1015
    %v1020 = vsub.f32 %v1017, %v1019
    %s1021 = sld [smem:[#allocation11 + $0x1]]
    %v1022 = vstv %s1021
    %v1023 = vmul.f32 %v114, %v1022
    %s1024 = sld [smem:[#allocation11 + $0x4]]
    %v1025 = vstv %s1024
    %v1026 = vmul.f32 %v115, %v1025
    %v1027 = vadd.f32 %v1023, %v1026
    %s1028 = sld [smem:[#allocation11 + $0x7]]
    %v1029 = vstv %s1028
    %v1030 = vmul.f32 %v116, %v1029
    %v1031 = vadd.f32 %v1027, %v1030
    %s1032 = sld [smem:[#allocation13 + $0x8]]
    %v1033 = vstv %s1032
    %v1034 = vadd.f32 %v1031, %v1033
    %v1035 = vtanh.pop %v1034
    %v1036 = vmul.f32 %v1016, %v115
    %v1037 = vmul.f32 %v1018, %v1035
    %v1038 = vsub.f32 %v1036, %v1037
    %s1039 = sld [smem:[#allocation11 + $0x2]]
    %v1040 = vstv %s1039
    %v1041 = vmul.f32 %v114, %v1040
    %s1042 = sld [smem:[#allocation11 + $0x5]]
    %v1043 = vstv %s1042
    %v1044 = vmul.f32 %v115, %v1043
    %v1045 = vadd.f32 %v1041, %v1044
    %s1046 = sld [smem:[#allocation11 + $0x8]]
    %v1047 = vstv %s1046
    %v1048 = vmul.f32 %v116, %v1047
    %v1049 = vadd.f32 %v1045, %v1048
    %s1050 = sld [smem:[#allocation13 + $0x10]]
    %v1051 = vstv %s1050
    %v1052 = vadd.f32 %v1049, %v1051
    %v1053 = vtanh.pop %v1052
    %v1054 = vmul.f32 %v1016, %v116
    %v1055 = vmul.f32 %v1018, %v1053
    %v1056 = vsub.f32 %v1054, %v1055
    %v1057 = vmax.f32 %v1020, -1.0
    %v1058 = vmin.f32 %v1057, 1.0
    %1059 = vst [vmem:[#allocation16] sm:$0xf] %v1058
    %v1060 = vmax.f32 %v1038, -1.0
    %v1061 = vmin.f32 %v1060, 1.0
    %s1062 = scalar_lea.vmem [#allocation16], 4
    %1063 = vst [vmem:[%s1062] sm:$0xf] %v1061
    %v1064 = vmax.f32 %v1056, -1.0
    %v1065 = vmin.f32 %v1064, 1.0
    %s1066 = scalar_lea.vmem [#allocation16], 8
    %1067 = vst [vmem:[%s1066] sm:$0xf] %v1065
    // Predicated region
    $region69: #{tpu_custom_call.1} parent=1 // pred_check
      _
    $region70: #{tpu_custom_call.1} parent=1 // pred_check_branch
      %1069 = sbr.rel (0) target = $region72
    $region71: #{tpu_custom_call.1} parent=1 // pred_region
      %s1071 = ssub.s32 192, 192
      %1072 = vsyncadd [#allocation5], %s1071
      %s1073 = sshll.u32 [#allocation16], 4
      %s1074 = int_to_ptr.vmem [resolvable:$true] %s1073
      %1079 = dma.vmem_to_hbm [thread:$0]  %s1074, 192, %s9, [#allocation5], 64, 64, 4
    $region72: #{tpu_custom_call.1} parent=1 // pred_fallthru
      _
    // Predicated region
    $region73: #{tpu_custom_call.1} parent=1 // pred_check
      _
    $region74: #{tpu_custom_call.1} parent=1 // pred_check_branch
      %1081 = sbr.rel (0) target = $region76
    $region75: #{tpu_custom_call.1} parent=1 // pred_region
      %1082 = dma.done [#allocation5], 192
    $region76: #{tpu_custom_call.1} parent=1 // pred_fallthru
      _
    %1083 = vsyncpa [#allocation5], 1
    %1084 = vsyncpa [#allocation6], 1
    %1085 = vsyncpa [#allocation12], 1
    %1086 = vsyncpa [#allocation15], 1
    %1087 = vsyncpa [#allocation7], 1
    %1088 = vsyncpa [#allocation9], 1

</llo_original>
